<compile_context>
chip_gen: v7x
topology: tpu7x:2x2x1
jax: 0.10.0
libtpu: 0.0.40
codegen_flags: <defaults>
</compile_context>

<pallas_src>
import math
from functools import partial

import jax
import jax.numpy as jnp
from jax.experimental import pallas as pl
from jax.experimental.pallas import tpu as pltpu

# ----- model hyper-parameters (small, consistent with the module defaults) -----
SEQ_LEN = 16          # seq_len
N_FEAT = 8            # number of input variates (tokens of the inverted transformer)
D_MODEL = 32          # d_model ("units")
N_HEADS = 2           # n_heads
D_FF = 4 * D_MODEL    # default d_ff of EncoderLayer  (= 128)
PRED_LEN = 4          # pred_len
D_HEAD = D_MODEL // N_HEADS
EPS_STAT = 1e-5       # eps in the instance-norm of the forward pass
EPS_LN = 1e-5         # nn.LayerNorm default eps
# n_layers = 1 (module default) — a single encoder layer is unrolled in the kernel.

# --- lane-packed weight slab column offsets (each weight starts on a 128-lane
#     boundary so the static slices are cheap prefix slices) -------------------
_WQKV_OFF = 0                 # (D_MODEL, 3*D_MODEL)   in cols [  0,  96)
_WO_OFF = 128                 # (D_MODEL, D_MODEL)     in cols [128, 160)
_W1_OFF = 256                 # (D_MODEL, D_FF)        in cols [256, 384)
_WP_OFF = 384                 # (D_MODEL, PRED_LEN)    in cols [384, 388)
_WLANE_WIDTH = 512

# --- bias/LayerNorm slab: one parameter per row, width 128 -------------------
(_B_EMB, _B_QKV, _B_O, _LN1G, _LN1B, _B_1, _B_2,
 _LN2G, _LN2B, _LNFG, _LNFB, _B_P) = range(12)
_BIAS_ROWS = 12
_BIAS_WIDTH = 128


def _layernorm(x, g, b):
    """torch.nn.LayerNorm over the last dim (biased variance, eps inside sqrt)."""
    mu = jnp.mean(x, axis=-1, keepdims=True)
    xc = x - mu
    var = jnp.mean(xc * xc, axis=-1, keepdims=True)
    return xc * jax.lax.rsqrt(var + EPS_LN) * g + b


def _make_kernel(bt):
    """Build the kernel body for a batch tile of `bt` batch elements."""
    scale = 1.0 / math.sqrt(D_HEAD)

    def kernel(x_ref, wrow_ref, wlane_ref, bias_ref, out_ref):
        x = x_ref[...]                                     # (bt*N, L) rows = (batch, variate)

        # ---- use_norm: per-(batch, variate) mean / std over the time axis ----
        mean = jnp.mean(x, axis=1, keepdims=True)          # (R, 1)
        xc = x - mean
        var = jnp.mean(xc * xc, axis=1, keepdims=True)     # unbiased=False
        inv_std = jax.lax.rsqrt(var + EPS_STAT)            # EUP rsqrt
        stdev = (var + EPS_STAT) * inv_std                 # == sqrt(var + eps)
        xn = xc * inv_std                                  # (R, L)

        # ---- static slices out of the packed parameter slabs ----
        w_emb = wrow_ref[0:SEQ_LEN, :]                         # (L, D)
        w2 = wrow_ref[SEQ_LEN:SEQ_LEN + D_FF, :]               # (D_FF, D)
        wqkv = wlane_ref[:, _WQKV_OFF:_WQKV_OFF + 3 * D_MODEL]  # (D, 3D)
        wo = wlane_ref[:, _WO_OFF:_WO_OFF + D_MODEL]            # (D, D)
        w1 = wlane_ref[:, _W1_OFF:_W1_OFF + D_FF]               # (D, D_FF)
        wp = wlane_ref[:, _WP_OFF:_WP_OFF + PRED_LEN]           # (D, P)

        b_emb = bias_ref[_B_EMB:_B_EMB + 1, 0:D_MODEL]
        b_qkv = bias_ref[_B_QKV:_B_QKV + 1, 0:3 * D_MODEL]
        b_o = bias_ref[_B_O:_B_O + 1, 0:D_MODEL]
        ln1g = bias_ref[_LN1G:_LN1G + 1, 0:D_MODEL]
        ln1b = bias_ref[_LN1B:_LN1B + 1, 0:D_MODEL]
        b_1 = bias_ref[_B_1:_B_1 + 1, 0:D_FF]
        b_2 = bias_ref[_B_2:_B_2 + 1, 0:D_MODEL]
        ln2g = bias_ref[_LN2G:_LN2G + 1, 0:D_MODEL]
        ln2b = bias_ref[_LN2B:_LN2B + 1, 0:D_MODEL]
        lnfg = bias_ref[_LNFG:_LNFG + 1, 0:D_MODEL]
        lnfb = bias_ref[_LNFB:_LNFB + 1, 0:D_MODEL]
        b_p = bias_ref[_B_P:_B_P + 1, 0:PRED_LEN]

        # ---- DataEmbedding_inverted: Linear(seq_len -> d_model) per row ----
        h = jnp.dot(xn, w_emb, preferred_element_type=jnp.float32) + b_emb      # (R, D)

        # ---- fused Q/K/V projection ----
        qkv = jnp.dot(h, wqkv, preferred_element_type=jnp.float32) + b_qkv       # (R, 3D)
        q = qkv[:, 0:D_MODEL]
        k = qkv[:, D_MODEL:2 * D_MODEL]
        v = qkv[:, 2 * D_MODEL:3 * D_MODEL]

        # ---- multi-head full attention (per batch element within the tile) ----
        # Accumulate each head directly through its slice of the output
        # projection: no lane-axis concat of head outputs.
        attn_rows = []
        for b in range(bt):                                 # static unroll over batch
            r0, r1 = b * N_FEAT, (b + 1) * N_FEAT
            acc = jnp.zeros((N_FEAT, D_MODEL), jnp.float32)
            for hd in range(N_HEADS):                       # static unroll, 2 heads
                c0, c1 = hd * D_HEAD, (hd + 1) * D_HEAD
                qh = q[r0:r1, c0:c1]                        # (N, D_HEAD)
                kh = k[r0:r1, c0:c1]
                vh = v[r0:r1, c0:c1]
                s = jax.lax.dot_general(qh, kh, (((1,), (1,)), ((), ())),
                                        preferred_element_type=jnp.float32) * scale
                s = s - jnp.max(s, axis=-1, keepdims=True)
                p = jnp.exp(s)
                p = p * pl.reciprocal(jnp.sum(p, axis=-1, keepdims=True), approx=True)
                oh = jnp.dot(p, vh, preferred_element_type=jnp.float32)          # (N, D_HEAD)
                acc = acc + jnp.dot(oh, wo[c0:c1, :],
                                    preferred_element_type=jnp.float32)          # (N, D)
            attn_rows.append(acc)
        attn = attn_rows[0] if bt == 1 else jnp.concatenate(attn_rows, axis=0)    # (R, D)
        attn = attn + b_o

        x1 = _layernorm(h + attn, ln1g, ln1b)               # norm1(x + attn)

        # conv1d(kernel=1) FFN == per-token Linear; activation = relu
        y = jnp.dot(x1, w1, preferred_element_type=jnp.float32) + b_1
        y = jnp.maximum(y, 0.0)
        y = jnp.dot(y, w2, preferred_element_type=jnp.float32) + b_2

        x2 = _layernorm(x1 + y, ln2g, ln2b)                 # norm2(x + y)

        # ---- Encoder final LayerNorm ----
        enc = _layernorm(x2, lnfg, lnfb)                    # (R, D)

        # ---- projector: Linear(d_model -> pred_len) ----
        dec = jnp.dot(enc, wp, preferred_element_type=jnp.float32) + b_p          # (R, P)

        # ---- de-normalization: scale/shift per row, broadcast over pred_len ----
        # PRED_LEN=4 -> masked narrow store; lane-dense repacking only pays once
        # B*PRED_LEN approaches 128, so we keep the natural layout here.
        out_ref[...] = dec * stdev + mean                   # (R, P)

    return kernel


def make_params(key):
    """Deterministic init mimicking nn.Linear defaults, packed into 3 slabs."""
    def dense(k, fan_in, fan_out):
        kw, kb = jax.random.split(k)
        lim = 1.0 / math.sqrt(fan_in)
        w = jax.random.uniform(kw, (fan_in, fan_out), jnp.float32, -lim, lim)
        b = jax.random.uniform(kb, (fan_out,), jnp.float32, -lim, lim)
        return w, b

    keys = jax.random.split(key, 8)
    w_emb, b_emb = dense(keys[0], SEQ_LEN, D_MODEL)
    wq, bq = dense(keys[1], D_MODEL, D_MODEL)
    wk, bk = dense(keys[2], D_MODEL, D_MODEL)
    wv, bv = dense(keys[3], D_MODEL, D_MODEL)
    wo, bo = dense(keys[4], D_MODEL, D_MODEL)
    w1, b1 = dense(keys[5], D_MODEL, D_FF)
    w2, b2 = dense(keys[6], D_FF, D_MODEL)
    wp, bp = dense(keys[7], D_MODEL, PRED_LEN)

    ones = jnp.ones((D_MODEL,), jnp.float32)
    zeros = jnp.zeros((D_MODEL,), jnp.float32)

    # slab 1: row-packed weights whose fan_out is D_MODEL (w_emb on top of w2)
    w_row = jnp.concatenate([w_emb, w2], axis=0)            # (SEQ_LEN + D_FF, D_MODEL)

    # slab 2: lane-packed weights whose fan_in is D_MODEL; each weight starts on
    # a 128-lane boundary for cheap static prefix slices.
    def pad_cols(a, width):
        return jnp.pad(a, ((0, 0), (0, width - a.shape[1])))
    wqkv = jnp.concatenate([wq, wk, wv], axis=1)            # (D, 3D)
    w_lane = jnp.concatenate(
        [pad_cols(wqkv, 128), pad_cols(wo, 128), w1, pad_cols(wp, 128)],
        axis=1)                                             # (D_MODEL, 512)
    assert w_lane.shape == (D_MODEL, _WLANE_WIDTH)

    # slab 3: biases + LayerNorm params, one row (<=128 lanes) each
    def row(v):
        return jnp.pad(v, (0, _BIAS_WIDTH - v.shape[0]))[None, :]
    bias = jnp.concatenate([
        row(b_emb),
        row(jnp.concatenate([bq, bk, bv])),
        row(bo),
        row(ones), row(zeros),        # LayerNorm 1
        row(b1),
        row(b2),
        row(ones), row(zeros),        # LayerNorm 2
        row(ones), row(zeros),        # Encoder final LayerNorm
        row(bp),
    ], axis=0)                                              # (12, 128)
    assert bias.shape == (_BIAS_ROWS, _BIAS_WIDTH)

    return (w_row, w_lane, bias)


@partial(jax.jit, static_argnames=("num_batch_tiles",))
def itransformer_forward(x, params, num_batch_tiles=1):
    """x: (B, seq_len, N_features) -> (B, pred_len, N_features), matching torch semantics.

    num_batch_tiles=1 (default) runs the whole batch in a single grid step,
    which minimizes per-step overhead on v5e/v6e.  On v7x (2 TensorCores per
    chip) pass num_batch_tiles=2 so both cores get a parallel tile.
    """
    B, L, N = x.shape
    assert L == SEQ_LEN and N == N_FEAT
    assert B % num_batch_tiles == 0
    bt = B // num_batch_tiles
    rows = bt * N

    xt = jnp.transpose(x, (0, 2, 1)).astype(jnp.float32)    # (B, N, L) variate-major
    xt = xt.reshape(num_batch_tiles, rows, L)               # one tile per grid step

    w_row, w_lane, bias = params

    out = pl.pallas_call(
        _make_kernel(bt),
        out_shape=jax.ShapeDtypeStruct((num_batch_tiles, rows, PRED_LEN), jnp.float32),
        grid=(num_batch_tiles,),
        in_specs=[
            pl.BlockSpec((None, rows, L), lambda t: (t, 0, 0)),
            pl.BlockSpec(w_row.shape, lambda t: (0, 0)),
            pl.BlockSpec(w_lane.shape, lambda t: (0, 0)),
            pl.BlockSpec(bias.shape, lambda t: (0, 0)),
        ],
        out_specs=pl.BlockSpec((None, rows, PRED_LEN), lambda t: (t, 0, 0)),
        compiler_params=pltpu.CompilerParams(dimension_semantics=("parallel",)),
    )(xt, w_row, w_lane, bias)

    out = out.reshape(B, N, PRED_LEN)
    return jnp.transpose(out, (0, 2, 1))                    # (B, pred_len, N)


if __name__ == "__main__":
    key = jax.random.PRNGKey(0)
    kx, kp = jax.random.split(key)
    x = jax.random.normal(kx, (2, SEQ_LEN, N_FEAT), jnp.float32)  # (B, seq_len, N)
    params = make_params(kp)

    out = itransformer_forward(x, params)                   # single grid step
    jax.block_until_ready(out)
    assert out.shape == (2, PRED_LEN, N_FEAT)
    assert bool(jnp.all(jnp.isfinite(out)))
    print("KERNEL_OK")
</pallas_src>

<mosaic_0001>
module attributes {stable_mosaic.version = 11 : i64} {
  func.func @kernel(%arg0: i32, %arg1: memref<1x16x16xf32, #tpu.memory_space<vmem>>, %arg2: memref<144x32xf32, #tpu.memory_space<vmem>>, %arg3: memref<32x512xf32, #tpu.memory_space<vmem>>, %arg4: memref<12x128xf32, #tpu.memory_space<vmem>>, %arg5: memref<1x16x4xf32, #tpu.memory_space<vmem>>) attributes {dimension_semantics = [#tpu.dimension_semantics<parallel>], iteration_bounds = array<i64: 1>, scalar_prefetch = 0 : i64, scratch_operands = 0 : i64, tpu.core_type = #tpu.core_type<tc>, window_params = [{transform_indices = @transform_0, window_bounds = array<i64: 1, 16, 16>}, {pipeline_mode = #tpu.pipeline_mode<synchronous>, transform_indices = @transform_1, window_bounds = array<i64: 144, 32>}, {pipeline_mode = #tpu.pipeline_mode<synchronous>, transform_indices = @transform_2, window_bounds = array<i64: 32, 512>}, {pipeline_mode = #tpu.pipeline_mode<synchronous>, transform_indices = @transform_3, window_bounds = array<i64: 12, 128>}, {transform_indices = @transform_4, window_bounds = array<i64: 1, 16, 4>}]} {
    %c0 = arith.constant 0 : index
    %c0_0 = arith.constant 0 : index
    %c0_1 = arith.constant 0 : index
    %0 = vector.load %arg1[%c0, %c0_0, %c0_1] : memref<1x16x16xf32, #tpu.memory_space<vmem>>, vector<1x16x16xf32>
    %1 = vector.shape_cast %0 : vector<1x16x16xf32> to vector<16x16xf32>
    %cst = arith.constant dense<0.000000e+00> : vector<16xf32>
    %2 = vector.multi_reduction <add>, %1, %cst [1] : vector<16x16xf32> to vector<16xf32>
    %3 = vector.shape_cast %2 : vector<16xf32> to vector<16x1xf32>
    %cst_2 = arith.constant 1.600000e+01 : f32
    %4 = vector.broadcast %cst_2 : f32 to vector<16x1xf32>
    %5 = arith.divf %3, %4 : vector<16x1xf32>
    %6 = vector.broadcast %5 : vector<16x1xf32> to vector<16x16xf32>
    %7 = arith.subf %1, %6 : vector<16x16xf32>
    %8 = arith.mulf %7, %7 : vector<16x16xf32>
    %cst_3 = arith.constant dense<0.000000e+00> : vector<16xf32>
    %9 = vector.multi_reduction <add>, %8, %cst_3 [1] : vector<16x16xf32> to vector<16xf32>
    %10 = vector.shape_cast %9 : vector<16xf32> to vector<16x1xf32>
    %cst_4 = arith.constant 1.600000e+01 : f32
    %11 = vector.broadcast %cst_4 : f32 to vector<16x1xf32>
    %12 = arith.divf %10, %11 : vector<16x1xf32>
    %cst_5 = arith.constant 9.99999974E-6 : f32
    %13 = vector.broadcast %cst_5 : f32 to vector<16x1xf32>
    %14 = arith.addf %12, %13 : vector<16x1xf32>
    %15 = math.rsqrt %14 : vector<16x1xf32>
    %cst_6 = arith.constant 9.99999974E-6 : f32
    %16 = vector.broadcast %cst_6 : f32 to vector<16x1xf32>
    %17 = arith.addf %12, %16 : vector<16x1xf32>
    %18 = arith.mulf %17, %15 : vector<16x1xf32>
    %19 = vector.broadcast %15 : vector<16x1xf32> to vector<16x16xf32>
    %20 = arith.mulf %7, %19 : vector<16x16xf32>
    %c0_7 = arith.constant 0 : index
    %c0_8 = arith.constant 0 : index
    %21 = vector.load %arg2[%c0_7, %c0_8] : memref<144x32xf32, #tpu.memory_space<vmem>>, vector<16x32xf32>
    %c16 = arith.constant 16 : index
    %c0_9 = arith.constant 0 : index
    %22 = vector.load %arg2[%c16, %c0_9] : memref<144x32xf32, #tpu.memory_space<vmem>>, vector<128x32xf32>
    %c0_10 = arith.constant 0 : index
    %c0_11 = arith.constant 0 : index
    %23 = vector.load %arg3[%c0_10, %c0_11] : memref<32x512xf32, #tpu.memory_space<vmem>>, vector<32x96xf32>
    %c0_12 = arith.constant 0 : index
    %c128 = arith.constant 128 : index
    %24 = vector.load %arg3[%c0_12, %c128] : memref<32x512xf32, #tpu.memory_space<vmem>>, vector<32x32xf32>
    %c0_13 = arith.constant 0 : index
    %c256 = arith.constant 256 : index
    %25 = vector.load %arg3[%c0_13, %c256] : memref<32x512xf32, #tpu.memory_space<vmem>>, vector<32x128xf32>
    %c0_14 = arith.constant 0 : index
    %c384 = arith.constant 384 : index
    %26 = vector.load %arg3[%c0_14, %c384] : memref<32x512xf32, #tpu.memory_space<vmem>>, vector<32x4xf32>
    %c0_15 = arith.constant 0 : index
    %c0_16 = arith.constant 0 : index
    %27 = vector.load %arg4[%c0_15, %c0_16] : memref<12x128xf32, #tpu.memory_space<vmem>>, vector<1x32xf32>
    %c1 = arith.constant 1 : index
    %c0_17 = arith.constant 0 : index
    %28 = vector.load %arg4[%c1, %c0_17] : memref<12x128xf32, #tpu.memory_space<vmem>>, vector<1x96xf32>
    %c2 = arith.constant 2 : index
    %c0_18 = arith.constant 0 : index
    %29 = vector.load %arg4[%c2, %c0_18] : memref<12x128xf32, #tpu.memory_space<vmem>>, vector<1x32xf32>
    %c3 = arith.constant 3 : index
    %c0_19 = arith.constant 0 : index
    %30 = vector.load %arg4[%c3, %c0_19] : memref<12x128xf32, #tpu.memory_space<vmem>>, vector<1x32xf32>
    %c4 = arith.constant 4 : index
    %c0_20 = arith.constant 0 : index
    %31 = vector.load %arg4[%c4, %c0_20] : memref<12x128xf32, #tpu.memory_space<vmem>>, vector<1x32xf32>
    %c5 = arith.constant 5 : index
    %c0_21 = arith.constant 0 : index
    %32 = vector.load %arg4[%c5, %c0_21] : memref<12x128xf32, #tpu.memory_space<vmem>>, vector<1x128xf32>
    %c6 = arith.constant 6 : index
    %c0_22 = arith.constant 0 : index
    %33 = vector.load %arg4[%c6, %c0_22] : memref<12x128xf32, #tpu.memory_space<vmem>>, vector<1x32xf32>
    %c7 = arith.constant 7 : index
    %c0_23 = arith.constant 0 : index
    %34 = vector.load %arg4[%c7, %c0_23] : memref<12x128xf32, #tpu.memory_space<vmem>>, vector<1x32xf32>
    %c8 = arith.constant 8 : index
    %c0_24 = arith.constant 0 : index
    %35 = vector.load %arg4[%c8, %c0_24] : memref<12x128xf32, #tpu.memory_space<vmem>>, vector<1x32xf32>
    %c9 = arith.constant 9 : index
    %c0_25 = arith.constant 0 : index
    %36 = vector.load %arg4[%c9, %c0_25] : memref<12x128xf32, #tpu.memory_space<vmem>>, vector<1x32xf32>
    %c10 = arith.constant 10 : index
    %c0_26 = arith.constant 0 : index
    %37 = vector.load %arg4[%c10, %c0_26] : memref<12x128xf32, #tpu.memory_space<vmem>>, vector<1x32xf32>
    %c11 = arith.constant 11 : index
    %c0_27 = arith.constant 0 : index
    %38 = vector.load %arg4[%c11, %c0_27] : memref<12x128xf32, #tpu.memory_space<vmem>>, vector<1x4xf32>
    %cst_28 = arith.constant dense<0.000000e+00> : vector<16x32xf32>
    %39 = tpu.matmul %20, %21, %cst_28 {dimension_numbers = #tpu.dot_dimension_numbers<[1], [0], [0], [1], [0, 0, 1, 1], [], []>} : vector<16x16xf32>, vector<16x32xf32>, vector<16x32xf32> -> vector<16x32xf32>
    %40 = vector.broadcast %27 : vector<1x32xf32> to vector<16x32xf32>
    %41 = arith.addf %39, %40 : vector<16x32xf32>
    %cst_29 = arith.constant dense<0.000000e+00> : vector<16x96xf32>
    %42 = tpu.matmul %41, %23, %cst_29 {dimension_numbers = #tpu.dot_dimension_numbers<[1], [0], [0], [1], [0, 0, 1, 1], [], []>} : vector<16x32xf32>, vector<32x96xf32>, vector<16x96xf32> -> vector<16x96xf32>
    %43 = vector.broadcast %28 : vector<1x96xf32> to vector<16x96xf32>
    %44 = arith.addf %42, %43 : vector<16x96xf32>
    %45 = vector.extract_strided_slice %44 {offsets = [0, 0], sizes = [16, 32], strides = [1, 1]} : vector<16x96xf32> to vector<16x32xf32>
    %46 = vector.extract_strided_slice %44 {offsets = [0, 32], sizes = [16, 32], strides = [1, 1]} : vector<16x96xf32> to vector<16x32xf32>
    %47 = vector.extract_strided_slice %44 {offsets = [0, 64], sizes = [16, 32], strides = [1, 1]} : vector<16x96xf32> to vector<16x32xf32>
    %cst_30 = arith.constant 0.000000e+00 : f32
    %48 = vector.broadcast %cst_30 : f32 to vector<8x32xf32>
    %49 = vector.extract_strided_slice %45 {offsets = [0, 0], sizes = [8, 16], strides = [1, 1]} : vector<16x32xf32> to vector<8x16xf32>
    %50 = vector.extract_strided_slice %46 {offsets = [0, 0], sizes = [8, 16], strides = [1, 1]} : vector<16x32xf32> to vector<8x16xf32>
    %51 = vector.extract_strided_slice %47 {offsets = [0, 0], sizes = [8, 16], strides = [1, 1]} : vector<16x32xf32> to vector<8x16xf32>
    %cst_31 = arith.constant dense<0.000000e+00> : vector<8x8xf32>
    %52 = tpu.matmul %49, %50, %cst_31 {dimension_numbers = #tpu.dot_dimension_numbers<[1], [1], [0], [0], [0, 0, 1, 0], [], []>} : vector<8x16xf32>, vector<8x16xf32>, vector<8x8xf32> -> vector<8x8xf32>
    %cst_32 = arith.constant 2.500000e-01 : f32
    %53 = vector.broadcast %cst_32 : f32 to vector<8x8xf32>
    %54 = arith.mulf %52, %53 : vector<8x8xf32>
    %cst_33 = arith.constant dense<0xFF800000> : vector<8xf32>
    %55 = vector.multi_reduction <maximumf>, %54, %cst_33 [1] : vector<8x8xf32> to vector<8xf32>
    %56 = vector.shape_cast %55 : vector<8xf32> to vector<8x1xf32>
    %57 = vector.broadcast %56 : vector<8x1xf32> to vector<8x8xf32>
    %58 = arith.subf %54, %57 : vector<8x8xf32>
    %59 = math.exp %58 : vector<8x8xf32>
    %cst_34 = arith.constant dense<0.000000e+00> : vector<8xf32>
    %60 = vector.multi_reduction <add>, %59, %cst_34 [1] : vector<8x8xf32> to vector<8xf32>
    %61 = vector.shape_cast %60 : vector<8xf32> to vector<8x1xf32>
    %62 = tpu.reciprocal %61 {approx = true} : vector<8x1xf32> -> vector<8x1xf32>
    %63 = vector.broadcast %62 : vector<8x1xf32> to vector<8x8xf32>
    %64 = arith.mulf %59, %63 : vector<8x8xf32>
    %cst_35 = arith.constant dense<0.000000e+00> : vector<8x16xf32>
    %65 = tpu.matmul %64, %51, %cst_35 {dimension_numbers = #tpu.dot_dimension_numbers<[1], [0], [0], [1], [0, 0, 1, 1], [], []>} : vector<8x8xf32>, vector<8x16xf32>, vector<8x16xf32> -> vector<8x16xf32>
    %66 = vector.extract_strided_slice %24 {offsets = [0, 0], sizes = [16, 32], strides = [1, 1]} : vector<32x32xf32> to vector<16x32xf32>
    %cst_36 = arith.constant dense<0.000000e+00> : vector<8x32xf32>
    %67 = tpu.matmul %65, %66, %cst_36 {dimension_numbers = #tpu.dot_dimension_numbers<[1], [0], [0], [1], [0, 0, 1, 1], [], []>} : vector<8x16xf32>, vector<16x32xf32>, vector<8x32xf32> -> vector<8x32xf32>
    %68 = arith.addf %48, %67 : vector<8x32xf32>
    %69 = vector.extract_strided_slice %45 {offsets = [0, 16], sizes = [8, 16], strides = [1, 1]} : vector<16x32xf32> to vector<8x16xf32>
    %70 = vector.extract_strided_slice %46 {offsets = [0, 16], sizes = [8, 16], strides = [1, 1]} : vector<16x32xf32> to vector<8x16xf32>
    %71 = vector.extract_strided_slice %47 {offsets = [0, 16], sizes = [8, 16], strides = [1, 1]} : vector<16x32xf32> to vector<8x16xf32>
    %cst_37 = arith.constant dense<0.000000e+00> : vector<8x8xf32>
    %72 = tpu.matmul %69, %70, %cst_37 {dimension_numbers = #tpu.dot_dimension_numbers<[1], [1], [0], [0], [0, 0, 1, 0], [], []>} : vector<8x16xf32>, vector<8x16xf32>, vector<8x8xf32> -> vector<8x8xf32>
    %cst_38 = arith.constant 2.500000e-01 : f32
    %73 = vector.broadcast %cst_38 : f32 to vector<8x8xf32>
    %74 = arith.mulf %72, %73 : vector<8x8xf32>
    %cst_39 = arith.constant dense<0xFF800000> : vector<8xf32>
    %75 = vector.multi_reduction <maximumf>, %74, %cst_39 [1] : vector<8x8xf32> to vector<8xf32>
    %76 = vector.shape_cast %75 : vector<8xf32> to vector<8x1xf32>
    %77 = vector.broadcast %76 : vector<8x1xf32> to vector<8x8xf32>
    %78 = arith.subf %74, %77 : vector<8x8xf32>
    %79 = math.exp %78 : vector<8x8xf32>
    %cst_40 = arith.constant dense<0.000000e+00> : vector<8xf32>
    %80 = vector.multi_reduction <add>, %79, %cst_40 [1] : vector<8x8xf32> to vector<8xf32>
    %81 = vector.shape_cast %80 : vector<8xf32> to vector<8x1xf32>
    %82 = tpu.reciprocal %81 {approx = true} : vector<8x1xf32> -> vector<8x1xf32>
    %83 = vector.broadcast %82 : vector<8x1xf32> to vector<8x8xf32>
    %84 = arith.mulf %79, %83 : vector<8x8xf32>
    %cst_41 = arith.constant dense<0.000000e+00> : vector<8x16xf32>
    %85 = tpu.matmul %84, %71, %cst_41 {dimension_numbers = #tpu.dot_dimension_numbers<[1], [0], [0], [1], [0, 0, 1, 1], [], []>} : vector<8x8xf32>, vector<8x16xf32>, vector<8x16xf32> -> vector<8x16xf32>
    %86 = vector.extract_strided_slice %24 {offsets = [16, 0], sizes = [16, 32], strides = [1, 1]} : vector<32x32xf32> to vector<16x32xf32>
    %cst_42 = arith.constant dense<0.000000e+00> : vector<8x32xf32>
    %87 = tpu.matmul %85, %86, %cst_42 {dimension_numbers = #tpu.dot_dimension_numbers<[1], [0], [0], [1], [0, 0, 1, 1], [], []>} : vector<8x16xf32>, vector<16x32xf32>, vector<8x32xf32> -> vector<8x32xf32>
    %88 = arith.addf %68, %87 : vector<8x32xf32>
    %cst_43 = arith.constant 0.000000e+00 : f32
    %89 = vector.broadcast %cst_43 : f32 to vector<8x32xf32>
    %90 = vector.extract_strided_slice %45 {offsets = [8, 0], sizes = [8, 16], strides = [1, 1]} : vector<16x32xf32> to vector<8x16xf32>
    %91 = vector.extract_strided_slice %46 {offsets = [8, 0], sizes = [8, 16], strides = [1, 1]} : vector<16x32xf32> to vector<8x16xf32>
    %92 = vector.extract_strided_slice %47 {offsets = [8, 0], sizes = [8, 16], strides = [1, 1]} : vector<16x32xf32> to vector<8x16xf32>
    %cst_44 = arith.constant dense<0.000000e+00> : vector<8x8xf32>
    %93 = tpu.matmul %90, %91, %cst_44 {dimension_numbers = #tpu.dot_dimension_numbers<[1], [1], [0], [0], [0, 0, 1, 0], [], []>} : vector<8x16xf32>, vector<8x16xf32>, vector<8x8xf32> -> vector<8x8xf32>
    %cst_45 = arith.constant 2.500000e-01 : f32
    %94 = vector.broadcast %cst_45 : f32 to vector<8x8xf32>
    %95 = arith.mulf %93, %94 : vector<8x8xf32>
    %cst_46 = arith.constant dense<0xFF800000> : vector<8xf32>
    %96 = vector.multi_reduction <maximumf>, %95, %cst_46 [1] : vector<8x8xf32> to vector<8xf32>
    %97 = vector.shape_cast %96 : vector<8xf32> to vector<8x1xf32>
    %98 = vector.broadcast %97 : vector<8x1xf32> to vector<8x8xf32>
    %99 = arith.subf %95, %98 : vector<8x8xf32>
    %100 = math.exp %99 : vector<8x8xf32>
    %cst_47 = arith.constant dense<0.000000e+00> : vector<8xf32>
    %101 = vector.multi_reduction <add>, %100, %cst_47 [1] : vector<8x8xf32> to vector<8xf32>
    %102 = vector.shape_cast %101 : vector<8xf32> to vector<8x1xf32>
    %103 = tpu.reciprocal %102 {approx = true} : vector<8x1xf32> -> vector<8x1xf32>
    %104 = vector.broadcast %103 : vector<8x1xf32> to vector<8x8xf32>
    %105 = arith.mulf %100, %104 : vector<8x8xf32>
    %cst_48 = arith.constant dense<0.000000e+00> : vector<8x16xf32>
    %106 = tpu.matmul %105, %92, %cst_48 {dimension_numbers = #tpu.dot_dimension_numbers<[1], [0], [0], [1], [0, 0, 1, 1], [], []>} : vector<8x8xf32>, vector<8x16xf32>, vector<8x16xf32> -> vector<8x16xf32>
    %107 = vector.extract_strided_slice %24 {offsets = [0, 0], sizes = [16, 32], strides = [1, 1]} : vector<32x32xf32> to vector<16x32xf32>
    %cst_49 = arith.constant dense<0.000000e+00> : vector<8x32xf32>
    %108 = tpu.matmul %106, %107, %cst_49 {dimension_numbers = #tpu.dot_dimension_numbers<[1], [0], [0], [1], [0, 0, 1, 1], [], []>} : vector<8x16xf32>, vector<16x32xf32>, vector<8x32xf32> -> vector<8x32xf32>
    %109 = arith.addf %89, %108 : vector<8x32xf32>
    %110 = vector.extract_strided_slice %45 {offsets = [8, 16], sizes = [8, 16], strides = [1, 1]} : vector<16x32xf32> to vector<8x16xf32>
    %111 = vector.extract_strided_slice %46 {offsets = [8, 16], sizes = [8, 16], strides = [1, 1]} : vector<16x32xf32> to vector<8x16xf32>
    %112 = vector.extract_strided_slice %47 {offsets = [8, 16], sizes = [8, 16], strides = [1, 1]} : vector<16x32xf32> to vector<8x16xf32>
    %cst_50 = arith.constant dense<0.000000e+00> : vector<8x8xf32>
    %113 = tpu.matmul %110, %111, %cst_50 {dimension_numbers = #tpu.dot_dimension_numbers<[1], [1], [0], [0], [0, 0, 1, 0], [], []>} : vector<8x16xf32>, vector<8x16xf32>, vector<8x8xf32> -> vector<8x8xf32>
    %cst_51 = arith.constant 2.500000e-01 : f32
    %114 = vector.broadcast %cst_51 : f32 to vector<8x8xf32>
    %115 = arith.mulf %113, %114 : vector<8x8xf32>
    %cst_52 = arith.constant dense<0xFF800000> : vector<8xf32>
    %116 = vector.multi_reduction <maximumf>, %115, %cst_52 [1] : vector<8x8xf32> to vector<8xf32>
    %117 = vector.shape_cast %116 : vector<8xf32> to vector<8x1xf32>
    %118 = vector.broadcast %117 : vector<8x1xf32> to vector<8x8xf32>
    %119 = arith.subf %115, %118 : vector<8x8xf32>
    %120 = math.exp %119 : vector<8x8xf32>
    %cst_53 = arith.constant dense<0.000000e+00> : vector<8xf32>
    %121 = vector.multi_reduction <add>, %120, %cst_53 [1] : vector<8x8xf32> to vector<8xf32>
    %122 = vector.shape_cast %121 : vector<8xf32> to vector<8x1xf32>
    %123 = tpu.reciprocal %122 {approx = true} : vector<8x1xf32> -> vector<8x1xf32>
    %124 = vector.broadcast %123 : vector<8x1xf32> to vector<8x8xf32>
    %125 = arith.mulf %120, %124 : vector<8x8xf32>
    %cst_54 = arith.constant dense<0.000000e+00> : vector<8x16xf32>
    %126 = tpu.matmul %125, %112, %cst_54 {dimension_numbers = #tpu.dot_dimension_numbers<[1], [0], [0], [1], [0, 0, 1, 1], [], []>} : vector<8x8xf32>, vector<8x16xf32>, vector<8x16xf32> -> vector<8x16xf32>
    %127 = vector.extract_strided_slice %24 {offsets = [16, 0], sizes = [16, 32], strides = [1, 1]} : vector<32x32xf32> to vector<16x32xf32>
    %cst_55 = arith.constant dense<0.000000e+00> : vector<8x32xf32>
    %128 = tpu.matmul %126, %127, %cst_55 {dimension_numbers = #tpu.dot_dimension_numbers<[1], [0], [0], [1], [0, 0, 1, 1], [], []>} : vector<8x16xf32>, vector<16x32xf32>, vector<8x32xf32> -> vector<8x32xf32>
    %129 = arith.addf %109, %128 : vector<8x32xf32>
    %130 = tpu.concatenate %88, %129 in 0 : vector<8x32xf32>, vector<8x32xf32> -> vector<16x32xf32>
    %131 = vector.broadcast %29 : vector<1x32xf32> to vector<16x32xf32>
    %132 = arith.addf %130, %131 : vector<16x32xf32>
    %133 = arith.addf %41, %132 : vector<16x32xf32>
    %cst_56 = arith.constant dense<0.000000e+00> : vector<16xf32>
    %134 = vector.multi_reduction <add>, %133, %cst_56 [1] : vector<16x32xf32> to vector<16xf32>
    %135 = vector.shape_cast %134 : vector<16xf32> to vector<16x1xf32>
    %cst_57 = arith.constant 3.200000e+01 : f32
    %136 = vector.broadcast %cst_57 : f32 to vector<16x1xf32>
    %137 = arith.divf %135, %136 : vector<16x1xf32>
    %138 = vector.broadcast %137 : vector<16x1xf32> to vector<16x32xf32>
    %139 = arith.subf %133, %138 : vector<16x32xf32>
    %140 = arith.mulf %139, %139 : vector<16x32xf32>
    %cst_58 = arith.constant dense<0.000000e+00> : vector<16xf32>
    %141 = vector.multi_reduction <add>, %140, %cst_58 [1] : vector<16x32xf32> to vector<16xf32>
    %142 = vector.shape_cast %141 : vector<16xf32> to vector<16x1xf32>
    %cst_59 = arith.constant 3.200000e+01 : f32
    %143 = vector.broadcast %cst_59 : f32 to vector<16x1xf32>
    %144 = arith.divf %142, %143 : vector<16x1xf32>
    %cst_60 = arith.constant 9.99999974E-6 : f32
    %145 = vector.broadcast %cst_60 : f32 to vector<16x1xf32>
    %146 = arith.addf %144, %145 : vector<16x1xf32>
    %147 = math.rsqrt %146 : vector<16x1xf32>
    %148 = vector.broadcast %147 : vector<16x1xf32> to vector<16x32xf32>
    %149 = arith.mulf %139, %148 : vector<16x32xf32>
    %150 = vector.broadcast %30 : vector<1x32xf32> to vector<16x32xf32>
    %151 = arith.mulf %149, %150 : vector<16x32xf32>
    %152 = vector.broadcast %31 : vector<1x32xf32> to vector<16x32xf32>
    %153 = arith.addf %151, %152 : vector<16x32xf32>
    %cst_61 = arith.constant dense<0.000000e+00> : vector<16x128xf32>
    %154 = tpu.matmul %153, %25, %cst_61 {dimension_numbers = #tpu.dot_dimension_numbers<[1], [0], [0], [1], [0, 0, 1, 1], [], []>} : vector<16x32xf32>, vector<32x128xf32>, vector<16x128xf32> -> vector<16x128xf32>
    %155 = vector.broadcast %32 : vector<1x128xf32> to vector<16x128xf32>
    %156 = arith.addf %154, %155 : vector<16x128xf32>
    %cst_62 = arith.constant 0.000000e+00 : f32
    %157 = vector.broadcast %cst_62 : f32 to vector<16x128xf32>
    %158 = arith.maximumf %156, %157 : vector<16x128xf32>
    %cst_63 = arith.constant dense<0.000000e+00> : vector<16x32xf32>
    %159 = tpu.matmul %158, %22, %cst_63 {dimension_numbers = #tpu.dot_dimension_numbers<[1], [0], [0], [1], [0, 0, 1, 1], [], []>} : vector<16x128xf32>, vector<128x32xf32>, vector<16x32xf32> -> vector<16x32xf32>
    %160 = vector.broadcast %33 : vector<1x32xf32> to vector<16x32xf32>
    %161 = arith.addf %159, %160 : vector<16x32xf32>
    %162 = arith.addf %153, %161 : vector<16x32xf32>
    %cst_64 = arith.constant dense<0.000000e+00> : vector<16xf32>
    %163 = vector.multi_reduction <add>, %162, %cst_64 [1] : vector<16x32xf32> to vector<16xf32>
    %164 = vector.shape_cast %163 : vector<16xf32> to vector<16x1xf32>
    %cst_65 = arith.constant 3.200000e+01 : f32
    %165 = vector.broadcast %cst_65 : f32 to vector<16x1xf32>
    %166 = arith.divf %164, %165 : vector<16x1xf32>
    %167 = vector.broadcast %166 : vector<16x1xf32> to vector<16x32xf32>
    %168 = arith.subf %162, %167 : vector<16x32xf32>
    %169 = arith.mulf %168, %168 : vector<16x32xf32>
    %cst_66 = arith.constant dense<0.000000e+00> : vector<16xf32>
    %170 = vector.multi_reduction <add>, %169, %cst_66 [1] : vector<16x32xf32> to vector<16xf32>
    %171 = vector.shape_cast %170 : vector<16xf32> to vector<16x1xf32>
    %cst_67 = arith.constant 3.200000e+01 : f32
    %172 = vector.broadcast %cst_67 : f32 to vector<16x1xf32>
    %173 = arith.divf %171, %172 : vector<16x1xf32>
    %cst_68 = arith.constant 9.99999974E-6 : f32
    %174 = vector.broadcast %cst_68 : f32 to vector<16x1xf32>
    %175 = arith.addf %173, %174 : vector<16x1xf32>
    %176 = math.rsqrt %175 : vector<16x1xf32>
    %177 = vector.broadcast %176 : vector<16x1xf32> to vector<16x32xf32>
    %178 = arith.mulf %168, %177 : vector<16x32xf32>
    %179 = vector.broadcast %34 : vector<1x32xf32> to vector<16x32xf32>
    %180 = arith.mulf %178, %179 : vector<16x32xf32>
    %181 = vector.broadcast %35 : vector<1x32xf32> to vector<16x32xf32>
    %182 = arith.addf %180, %181 : vector<16x32xf32>
    %cst_69 = arith.constant dense<0.000000e+00> : vector<16xf32>
    %183 = vector.multi_reduction <add>, %182, %cst_69 [1] : vector<16x32xf32> to vector<16xf32>
    %184 = vector.shape_cast %183 : vector<16xf32> to vector<16x1xf32>
    %cst_70 = arith.constant 3.200000e+01 : f32
    %185 = vector.broadcast %cst_70 : f32 to vector<16x1xf32>
    %186 = arith.divf %184, %185 : vector<16x1xf32>
    %187 = vector.broadcast %186 : vector<16x1xf32> to vector<16x32xf32>
    %188 = arith.subf %182, %187 : vector<16x32xf32>
    %189 = arith.mulf %188, %188 : vector<16x32xf32>
    %cst_71 = arith.constant dense<0.000000e+00> : vector<16xf32>
    %190 = vector.multi_reduction <add>, %189, %cst_71 [1] : vector<16x32xf32> to vector<16xf32>
    %191 = vector.shape_cast %190 : vector<16xf32> to vector<16x1xf32>
    %cst_72 = arith.constant 3.200000e+01 : f32
    %192 = vector.broadcast %cst_72 : f32 to vector<16x1xf32>
    %193 = arith.divf %191, %192 : vector<16x1xf32>
    %cst_73 = arith.constant 9.99999974E-6 : f32
    %194 = vector.broadcast %cst_73 : f32 to vector<16x1xf32>
    %195 = arith.addf %193, %194 : vector<16x1xf32>
    %196 = math.rsqrt %195 : vector<16x1xf32>
    %197 = vector.broadcast %196 : vector<16x1xf32> to vector<16x32xf32>
    %198 = arith.mulf %188, %197 : vector<16x32xf32>
    %199 = vector.broadcast %36 : vector<1x32xf32> to vector<16x32xf32>
    %200 = arith.mulf %198, %199 : vector<16x32xf32>
    %201 = vector.broadcast %37 : vector<1x32xf32> to vector<16x32xf32>
    %202 = arith.addf %200, %201 : vector<16x32xf32>
    %cst_74 = arith.constant dense<0.000000e+00> : vector<16x4xf32>
    %203 = tpu.matmul %202, %26, %cst_74 {dimension_numbers = #tpu.dot_dimension_numbers<[1], [0], [0], [1], [0, 0, 1, 1], [], []>} : vector<16x32xf32>, vector<32x4xf32>, vector<16x4xf32> -> vector<16x4xf32>
    %204 = vector.broadcast %38 : vector<1x4xf32> to vector<16x4xf32>
    %205 = arith.addf %203, %204 : vector<16x4xf32>
    %206 = vector.broadcast %18 : vector<16x1xf32> to vector<16x4xf32>
    %207 = arith.mulf %205, %206 : vector<16x4xf32>
    %208 = vector.broadcast %5 : vector<16x1xf32> to vector<16x4xf32>
    %209 = arith.addf %207, %208 : vector<16x4xf32>
    %c0_75 = arith.constant 0 : index
    %c0_76 = arith.constant 0 : index
    %c0_77 = arith.constant 0 : index
    %210 = vector.load %arg5[%c0_75, %c0_76, %c0_77] : memref<1x16x4xf32, #tpu.memory_space<vmem>>, vector<1x16x4xf32>
    %211 = vector.shape_cast %210 : vector<1x16x4xf32> to vector<16x4xf32>
    %212 = vector.shape_cast %209 : vector<16x4xf32> to vector<1x16x4xf32>
    tpu.vector_store %arg5[%c0_75, %c0_76, %c0_77], %212 {strides = array<i32>} : memref<1x16x4xf32, #tpu.memory_space<vmem>>, vector<1x16x4xf32>,
    return
  }
  func.func @transform_0(%arg0: i32) -> (i32, i32, i32) {
    %c0_i32 = arith.constant 0 : i32
    %c0_i32_0 = arith.constant 0 : i32
    %c0_i32_1 = arith.constant 0 : i32
    return %arg0, %c0_i32, %c0_i32_0 : i32, i32, i32
  }
  func.func @transform_1(%arg0: i32) -> (i32, i32) {
    %c0_i32 = arith.constant 0 : i32
    %c0_i32_0 = arith.constant 0 : i32
    %c0_i32_1 = arith.constant 0 : i32
    return %c0_i32, %c0_i32_0 : i32, i32
  }
  func.func @transform_2(%arg0: i32) -> (i32, i32) {
    %c0_i32 = arith.constant 0 : i32
    %c0_i32_0 = arith.constant 0 : i32
    %c0_i32_1 = arith.constant 0 : i32
    return %c0_i32, %c0_i32_0 : i32, i32
  }
  func.func @transform_3(%arg0: i32) -> (i32, i32) {
    %c0_i32 = arith.constant 0 : i32
    %c0_i32_0 = arith.constant 0 : i32
    %c0_i32_1 = arith.constant 0 : i32
    return %c0_i32, %c0_i32_0 : i32, i32
  }
  func.func @transform_4(%arg0: i32) -> (i32, i32, i32) {
    %c0_i32 = arith.constant 0 : i32
    %c0_i32_0 = arith.constant 0 : i32
    %c0_i32_1 = arith.constant 0 : i32
    return %arg0, %c0_i32, %c0_i32_0 : i32, i32, i32
  }
}

</mosaic_0001>

<llo_original>
// kernel: itransformer_forward.1
$region0: #{itransformer_forward.1}
  #allocation0 [shape = 'u32[]', space=smem, size = 0x4, offset = 0x4, fixed_abs, tag = 'smem constant byte address 0x4 - core index']
  #allocation1 [shape = 'u32[144,128]{1,0:T(1,128)}', space=vmem, size = 0x12000, scoped, tag = 'internal scratch']
  %s0 = inlined_call_operand.vmem [shape: f32[1,16,16], index: 0, kind: input, shape index: {}]
  %s1 = inlined_call_operand.vmem [shape: f32[144,32], index: 1, kind: input, shape index: {}]
  %s2 = inlined_call_operand.vmem [shape: f32[32,512], index: 2, kind: input, shape index: {}]
  %s3 = inlined_call_operand.vmem [shape: f32[12,128], index: 3, kind: input, shape index: {}]
  %s4 = inlined_call_operand.vmem [shape: f32[1,16,4], index: 4, kind: output, shape index: {}]
  %s5 = sld [smem:[#allocation0]]
  $region26: #{itransformer_forward.1} parent=0
    _
  %s7 = ssub.s32 1, %s5
  %s8 = scalar_select 0, %s7, %s5
  // Predicated region
  $region2: #{itransformer_forward.1} parent=0 // pred_check
    _
  $region3: #{itransformer_forward.1} parent=0 // pred_check_branch
    %10 = sbr.rel (0) target = $region5
  $region4: #{itransformer_forward.1} parent=0 // pred_region
    _
  $region5: #{itransformer_forward.1} parent=0 // pred_fallthru
    _
  // Predicated region
  $region6: #{itransformer_forward.1} parent=0 // pred_check
    _
  $region7: #{itransformer_forward.1} parent=0 // pred_check_branch
    %12 = sbr.rel (0) target = $region9
  $region8: #{itransformer_forward.1} parent=0 // pred_region
    _
  $region9: #{itransformer_forward.1} parent=0 // pred_fallthru
    _
  // Predicated region
  $region10: #{itransformer_forward.1} parent=0 // pred_check
    _
  $region11: #{itransformer_forward.1} parent=0 // pred_check_branch
    %14 = sbr.rel (0) target = $region13
  $region12: #{itransformer_forward.1} parent=0 // pred_region
    _
  $region13: #{itransformer_forward.1} parent=0 // pred_fallthru
    _
  // Predicated region
  $region14: #{itransformer_forward.1} parent=0 // pred_check
    _
  $region15: #{itransformer_forward.1} parent=0 // pred_check_branch
    %16 = sbr.rel (0) target = $region17
  $region16: #{itransformer_forward.1} parent=0 // pred_region
    _
  $region17: #{itransformer_forward.1} parent=0 // pred_fallthru
    _
  %v17 = vld [vmem:[%s0] sm:$0xff]
  %v18 = vld [vmem:[%s0 + $0x8] sm:$0xff]
  %vm19 = vcmask 130048
  %v20 = vsel %vm19, %v17, 0.0
  %21 = vadd.xlane.f32.xlu0 %v20
  %v22 = vpop.xlane.xlu0 %21
  %v23 = vsel %vm19, %v18, 0.0
  %24 = vadd.xlane.f32.xlu0 %v23
  %v25 = vpop.xlane.xlu0 %24
  %v26 = vrcp.pop 16.0
  %v27 = vmul.f32 %v22, %v26
  %v28 = vmul.f32 %v25, %v26
  %v29 = vsub.f32 %v17, %v27
  %v30 = vsub.f32 %v18, %v28
  %v31 = vmul.f32 %v29, %v29
  %v32 = vmul.f32 %v30, %v30
  %v33 = vsel %vm19, %v31, 0.0
  %34 = vadd.xlane.f32.xlu0 %v33
  %v35 = vpop.xlane.xlu0 %34
  %v36 = vsel %vm19, %v32, 0.0
  %37 = vadd.xlane.f32.xlu0 %v36
  %v38 = vpop.xlane.xlu0 %37
  %v39 = vmul.f32 %v35, %v26
  %v40 = vmul.f32 %v38, %v26
  %v41 = vadd.f32 %v39, 1e-05
  %v42 = vadd.f32 %v40, 1e-05
  %v43 = vrsqrt.pop %v41
  %v44 = vrsqrt.pop %v42
  %v45 = vmul.f32 %v41, %v43
  %v46 = vmul.f32 %v42, %v44
  %v47 = vmul.f32 %v29, %v43
  %v48 = vmul.f32 %v30, %v44
  %v49 = vld [vmem:[%s1] sm:$0xff]
  %v50 = vld [vmem:[%s1 + $0x8] sm:$0xff]
  %v51 = vld [vmem:[%s1 + $0x10] sm:$0xff]
  %v52 = vld [vmem:[%s1 + $0x18] sm:$0xff]
  %v53 = vld [vmem:[%s1 + $0x20] sm:$0xff]
  %v54 = vld [vmem:[%s1 + $0x28] sm:$0xff]
  %v55 = vld [vmem:[%s1 + $0x30] sm:$0xff]
  %v56 = vld [vmem:[%s1 + $0x38] sm:$0xff]
  %v57 = vld [vmem:[%s1 + $0x40] sm:$0xff]
  %v58 = vld [vmem:[%s1 + $0x48] sm:$0xff]
  %v59 = vld [vmem:[%s1 + $0x50] sm:$0xff]
  %v60 = vld [vmem:[%s1 + $0x58] sm:$0xff]
  %v61 = vld [vmem:[%s1 + $0x60] sm:$0xff]
  %v62 = vld [vmem:[%s1 + $0x68] sm:$0xff]
  %v63 = vld [vmem:[%s1 + $0x70] sm:$0xff]
  %v64 = vld [vmem:[%s1 + $0x78] sm:$0xff]
  %v65 = vld [vmem:[%s1 + $0x80] sm:$0xff]
  %v66 = vld [vmem:[%s1 + $0x88] sm:$0xff]
  %v67 = vld [vmem:[%s2] sm:$0xff]
  %v68 = vld [vmem:[%s2 + $0x20] sm:$0xff]
  %v69 = vld [vmem:[%s2 + $0x40] sm:$0xff]
  %v70 = vld [vmem:[%s2 + $0x60] sm:$0xff]
  %v71 = vld [vmem:[%s2 + $0x8] sm:$0xff]
  %v72 = vld [vmem:[%s2 + $0x28] sm:$0xff]
  %v73 = vld [vmem:[%s2 + $0x48] sm:$0xff]
  %v74 = vld [vmem:[%s2 + $0x68] sm:$0xff]
  %v75 = vld [vmem:[%s2 + $0x10] sm:$0xff]
  %v76 = vld [vmem:[%s2 + $0x30] sm:$0xff]
  %v77 = vld [vmem:[%s2 + $0x50] sm:$0xff]
  %v78 = vld [vmem:[%s2 + $0x70] sm:$0xff]
  %v79 = vld [vmem:[%s2 + $0x18] sm:$0xff]
  %v80 = vld [vmem:[%s2 + $0x38] sm:$0xff]
  %v81 = vld [vmem:[%s2 + $0x58] sm:$0xff]
  %v82 = vld [vmem:[%s2 + $0x78] sm:$0xff]
  %v83 = vld [vmem:[%s3] sm:$0x1]
  %v84 = vld [vmem:[%s3 + $0x1] sm:$0x1]
  %v85 = vld [vmem:[%s3 + $0x2] sm:$0x1]
  %v86 = vld [vmem:[%s3 + $0x3] sm:$0x1]
  %v87 = vld [vmem:[%s3 + $0x4] sm:$0x1]
  %v88 = vld [vmem:[%s3 + $0x5] sm:$0x1]
  %v89 = vld [vmem:[%s3 + $0x6] sm:$0x1]
  %v90 = vld [vmem:[%s3 + $0x7] sm:$0x1]
  %v91 = vld [vmem:[%s3 + $0x8] sm:$0x1]
  %v92 = vld [vmem:[%s3 + $0x9] sm:$0x1]
  %v93 = vld [vmem:[%s3 + $0xa] sm:$0x1]
  %v94 = vld [vmem:[%s3 + $0xb] sm:$0x1]
  %v95 = vlaneseq
  %v96 = vshrl.u32 %v95, 7
  %v97 = vsub.s32 0, %v96
  %v98 = vrot.slane %v83, %v97
  %v100 = vsel %vm19, %v47, 0
  %v103 = vsel %vm19, %v48, 0
  %105 = vmatprep.subr.mxu0 0.0
  %106 = vmatpush1.msra.mxu0 %v49
  %107 = vmatprep.subr.mxu0 0.0
  %108 = vmatpush1.msra.mxu0 %v50
  %109 = vmatprep.subr.mxu0 0.0
  %110 = vmatpush1.msra.mxu0 0.0
  %111 = vmatprep.subr.mxu0 0.0
  %112 = vmatpush1.msra.mxu0 0.0
  %113 = vmatprep.subr.mxu0 0.0
  %114 = vmatpush1.msra.mxu0 0.0
  %115 = vmatprep.subr.mxu0 0.0
  %116 = vmatpush1.msra.mxu0 0.0
  %117 = vmatprep.subr.mxu0 0.0
  %118 = vmatpush1.msra.mxu0 0.0
  %119 = vmatprep.subr.mxu0 0.0
  %120 = vmatpush1.msra.mxu0 0.0
  %121 = vmatprep.subr.mxu0 0.0
  %122 = vmatpush1.msra.mxu0 0.0
  %123 = vmatprep.subr.mxu0 0.0
  %124 = vmatpush1.msra.mxu0 0.0
  %125 = vmatprep.subr.mxu0 0.0
  %126 = vmatpush1.msra.mxu0 0.0
  %127 = vmatprep.subr.mxu0 0.0
  %128 = vmatpush1.msra.mxu0 0.0
  %129 = vmatprep.subr.mxu0 0.0
  %130 = vmatpush1.msra.mxu0 0.0
  %131 = vmatprep.subr.mxu0 0.0
  %132 = vmatpush1.msra.mxu0 0.0
  %133 = vmatprep.subr.mxu0 0.0
  %134 = vmatpush1.msra.mxu0 0.0
  %135 = vmatprep.subr.mxu0 0.0
  %136 = vmatpush1.msra.mxu0 0.0
  %137 = vmatprep.subr.mxu0 0.0
  %138 = vmatpush1.msra.mxu0 0.0
  %139 = vmatprep.subr.mxu0 0.0
  %140 = vmatpush1.msra.mxu0 0.0
  %141 = vmatprep.subr.mxu0 0.0
  %142 = vmatpush1.msra.mxu0 0.0
  %143 = vmatprep.subr.mxu0 0.0
  %144 = vmatpush1.msra.mxu0 0.0
  %145 = vmatprep.subr.mxu0 0.0
  %146 = vmatpush1.msra.mxu0 0.0
  %147 = vmatprep.subr.mxu0 0.0
  %148 = vmatpush1.msra.mxu0 0.0
  %149 = vmatprep.subr.mxu0 0.0
  %150 = vmatpush1.msra.mxu0 0.0
  %151 = vmatprep.subr.mxu0 0.0
  %152 = vmatpush1.msra.mxu0 0.0
  %153 = vmatprep.subr.mxu0 0.0
  %154 = vmatpush1.msra.mxu0 0.0
  %155 = vmatprep.subr.mxu0 0.0
  %156 = vmatpush1.msra.mxu0 0.0
  %157 = vmatprep.subr.mxu0 0.0
  %158 = vmatpush1.msra.mxu0 0.0
  %159 = vmatprep.subr.mxu0 0.0
  %160 = vmatpush1.msra.mxu0 0.0
  %161 = vmatprep.subr.mxu0 0.0
  %162 = vmatpush1.msra.mxu0 0.0
  %163 = vmatprep.subr.mxu0 0.0
  %164 = vmatpush1.msra.mxu0 0.0
  %165 = vmatprep.subr.mxu0 0.0
  %166 = vmatpush1.msra.mxu0 0.0
  %167 = vmatprep.subr.mxu0 0.0
  %168 = vmatpush1.msra.mxu0 0.0
  %169 = vmatprep.mubr.f32.mxu0 0.0
  %170 = vmatmul.mubr.f32.gmra.mrb[0].mxu0 %v100
  %v171 = vpop.f32.mrb[0].mxu0
  %v172 = vadd.f32 %v98, %v171
  %v173 = vpop.f32.mrb[0].mxu0
  %174 = vmatprep.mubr.f32.mxu0 0.0
  %175 = vmatmul.mubr.f32.gmra.mrb[0].mxu0 %v103
  %v176 = vpop.f32.mrb[0].mxu0
  %v177 = vadd.f32 %v98, %v176
  %v178 = vpop.f32.mrb[0].mxu0
  %179 = vdwg.mxu0
  %v180 = vlaneseq
  %v181 = vshrl.u32 %v180, 7
  %v182 = vsub.s32 0, %v181
  %v183 = vrot.slane %v84, %v182
  %vm184 = vcmask 261120
  %v186 = vsel %vm184, %v172, 0
  %v189 = vsel %vm184, %v177, 0
  %191 = vmatprep.subr.mxu0 0.0
  %192 = vmatpush1.msra.mxu0 %v67
  %193 = vmatprep.subr.mxu0 0.0
  %194 = vmatpush1.msra.mxu0 %v68
  %195 = vmatprep.subr.mxu0 0.0
  %196 = vmatpush1.msra.mxu0 %v69
  %197 = vmatprep.subr.mxu0 0.0
  %198 = vmatpush1.msra.mxu0 %v70
  %199 = vmatprep.subr.mxu0 0.0
  %200 = vmatpush1.msra.mxu0 0.0
  %201 = vmatprep.subr.mxu0 0.0
  %202 = vmatpush1.msra.mxu0 0.0
  %203 = vmatprep.subr.mxu0 0.0
  %204 = vmatpush1.msra.mxu0 0.0
  %205 = vmatprep.subr.mxu0 0.0
  %206 = vmatpush1.msra.mxu0 0.0
  %207 = vmatprep.subr.mxu0 0.0
  %208 = vmatpush1.msra.mxu0 0.0
  %209 = vmatprep.subr.mxu0 0.0
  %210 = vmatpush1.msra.mxu0 0.0
  %211 = vmatprep.subr.mxu0 0.0
  %212 = vmatpush1.msra.mxu0 0.0
  %213 = vmatprep.subr.mxu0 0.0
  %214 = vmatpush1.msra.mxu0 0.0
  %215 = vmatprep.subr.mxu0 0.0
  %216 = vmatpush1.msra.mxu0 0.0
  %217 = vmatprep.subr.mxu0 0.0
  %218 = vmatpush1.msra.mxu0 0.0
  %219 = vmatprep.subr.mxu0 0.0
  %220 = vmatpush1.msra.mxu0 0.0
  %221 = vmatprep.subr.mxu0 0.0
  %222 = vmatpush1.msra.mxu0 0.0
  %223 = vmatprep.subr.mxu0 0.0
  %224 = vmatpush1.msra.mxu0 0.0
  %225 = vmatprep.subr.mxu0 0.0
  %226 = vmatpush1.msra.mxu0 0.0
  %227 = vmatprep.subr.mxu0 0.0
  %228 = vmatpush1.msra.mxu0 0.0
  %229 = vmatprep.subr.mxu0 0.0
  %230 = vmatpush1.msra.mxu0 0.0
  %231 = vmatprep.subr.mxu0 0.0
  %232 = vmatpush1.msra.mxu0 0.0
  %233 = vmatprep.subr.mxu0 0.0
  %234 = vmatpush1.msra.mxu0 0.0
  %235 = vmatprep.subr.mxu0 0.0
  %236 = vmatpush1.msra.mxu0 0.0
  %237 = vmatprep.subr.mxu0 0.0
  %238 = vmatpush1.msra.mxu0 0.0
  %239 = vmatprep.subr.mxu0 0.0
  %240 = vmatpush1.msra.mxu0 0.0
  %241 = vmatprep.subr.mxu0 0.0
  %242 = vmatpush1.msra.mxu0 0.0
  %243 = vmatprep.subr.mxu0 0.0
  %244 = vmatpush1.msra.mxu0 0.0
  %245 = vmatprep.subr.mxu0 0.0
  %246 = vmatpush1.msra.mxu0 0.0
  %247 = vmatprep.subr.mxu0 0.0
  %248 = vmatpush1.msra.mxu0 0.0
  %249 = vmatprep.subr.mxu0 0.0
  %250 = vmatpush1.msra.mxu0 0.0
  %251 = vmatprep.subr.mxu0 0.0
  %252 = vmatpush1.msra.mxu0 0.0
  %253 = vmatprep.subr.mxu0 0.0
  %254 = vmatpush1.msra.mxu0 0.0
  %255 = vmatprep.mubr.f32.mxu0 0.0
  %256 = vmatmul.mubr.f32.gmra.mrb[0].mxu0 %v186
  %v257 = vpop.f32.mrb[0].mxu0
  %v258 = vadd.f32 %v183, %v257
  %v259 = vpop.f32.mrb[0].mxu0
  %260 = vmatprep.mubr.f32.mxu0 0.0
  %261 = vmatmul.mubr.f32.gmra.mrb[0].mxu0 %v189
  %v262 = vpop.f32.mrb[0].mxu0
  %v263 = vadd.f32 %v183, %v262
  %v264 = vpop.f32.mrb[0].mxu0
  %265 = vdwg.mxu0
  %267 = vrot.lane.b32.xlu0 %v258, 96
  %v268 = vpop.permute.xlu0 %267
  %v269 = vsel %vm19, %v258, 0
  %v271 = vsel %vm19, %v268, 0
  %273 = vmatprep.subr.mxu0 0.0
  %274 = vmatpush1.xpose.msra.mxu0 %v271
  %275 = vmatprep.subr.mxu0 0.0
  %276 = vmatpush1.xpose.msra.mxu0 0.0
  %277 = vmatprep.subr.mxu0 0.0
  %278 = vmatpush1.xpose.msra.mxu0 0.0
  %279 = vmatprep.subr.mxu0 0.0
  %280 = vmatpush1.xpose.msra.mxu0 0.0
  %281 = vmatprep.subr.mxu0 0.0
  %282 = vmatpush1.xpose.msra.mxu0 0.0
  %283 = vmatprep.subr.mxu0 0.0
  %284 = vmatpush1.xpose.msra.mxu0 0.0
  %285 = vmatprep.subr.mxu0 0.0
  %286 = vmatpush1.xpose.msra.mxu0 0.0
  %287 = vmatprep.subr.mxu0 0.0
  %288 = vmatpush1.xpose.msra.mxu0 0.0
  %289 = vmatprep.subr.mxu0 0.0
  %290 = vmatpush1.xpose.msra.mxu0 0.0
  %291 = vmatprep.subr.mxu0 0.0
  %292 = vmatpush1.xpose.msra.mxu0 0.0
  %293 = vmatprep.subr.mxu0 0.0
  %294 = vmatpush1.xpose.msra.mxu0 0.0
  %295 = vmatprep.subr.mxu0 0.0
  %296 = vmatpush1.xpose.msra.mxu0 0.0
  %297 = vmatprep.subr.mxu0 0.0
  %298 = vmatpush1.xpose.msra.mxu0 0.0
  %299 = vmatprep.subr.mxu0 0.0
  %300 = vmatpush1.xpose.msra.mxu0 0.0
  %301 = vmatprep.subr.mxu0 0.0
  %302 = vmatpush1.xpose.msra.mxu0 0.0
  %303 = vmatprep.subr.mxu0 0.0
  %304 = vmatpush1.xpose.msra.mxu0 0.0
  %305 = vmatprep.subr.mxu0 0.0
  %306 = vmatpush1.xpose.msra.mxu0 0.0
  %307 = vmatprep.subr.mxu0 0.0
  %308 = vmatpush1.xpose.msra.mxu0 0.0
  %309 = vmatprep.subr.mxu0 0.0
  %310 = vmatpush1.xpose.msra.mxu0 0.0
  %311 = vmatprep.subr.mxu0 0.0
  %312 = vmatpush1.xpose.msra.mxu0 0.0
  %313 = vmatprep.subr.mxu0 0.0
  %314 = vmatpush1.xpose.msra.mxu0 0.0
  %315 = vmatprep.subr.mxu0 0.0
  %316 = vmatpush1.xpose.msra.mxu0 0.0
  %317 = vmatprep.subr.mxu0 0.0
  %318 = vmatpush1.xpose.msra.mxu0 0.0
  %319 = vmatprep.subr.mxu0 0.0
  %320 = vmatpush1.xpose.msra.mxu0 0.0
  %321 = vmatprep.subr.mxu0 0.0
  %322 = vmatpush1.xpose.msra.mxu0 0.0
  %323 = vmatprep.subr.mxu0 0.0
  %324 = vmatpush1.xpose.msra.mxu0 0.0
  %325 = vmatprep.subr.mxu0 0.0
  %326 = vmatpush1.xpose.msra.mxu0 0.0
  %327 = vmatprep.subr.mxu0 0.0
  %328 = vmatpush1.xpose.msra.mxu0 0.0
  %329 = vmatprep.subr.mxu0 0.0
  %330 = vmatpush1.xpose.msra.mxu0 0.0
  %331 = vmatprep.subr.mxu0 0.0
  %332 = vmatpush1.xpose.msra.mxu0 0.0
  %333 = vmatprep.subr.mxu0 0.0
  %334 = vmatpush1.xpose.msra.mxu0 0.0
  %335 = vmatprep.subr.mxu0 0.0
  %336 = vmatpush1.xpose.msra.mxu0 0.0
  %337 = vmatprep.mubr.f32.mxu0 0.0
  %338 = vmatmul.mubr.f32.gmra.mrb[0].mxu0 %v269
  %v339 = vpop.f32.mrb[0].mxu0
  %v340 = vadd.f32 0.0, %v339
  %v341 = vpop.f32.mrb[0].mxu0
  %342 = vdwg.mxu0
  %v343 = vmul.f32 %v340, 0.25
  %vm344 = vcmask 64512
  %v345 = vsel %vm344, %v343, -inf
  %346 = vmax.xlane.f32.xlu0 %v345
  %v347 = vpop.xlane.xlu0 %346
  %v348 = vsub.f32 %v343, %v347
  %v349 = vmul.f32 %v348, 1.442695
  %v350 = vpow.pop %v349
  %v351 = vsel %vm344, %v350, 0.0
  %352 = vadd.xlane.f32.xlu0 %v351
  %v353 = vpop.xlane.xlu0 %352
  %v354 = vrcp.pop %v353
  %v355 = vmul.f32 %v350, %v354
  %356 = vrot.lane.b32.xlu0 %v258, 64
  %v357 = vpop.permute.xlu0 %356
  %v360 = vsel %vm344, %v355, 0
  %362 = vmatprep.subr.mxu0 0.0
  %363 = vmatpush1.msra.mxu0 %v357
  %364 = vmatprep.subr.mxu0 0.0
  %365 = vmatpush1.msra.mxu0 0.0
  %366 = vmatprep.subr.mxu0 0.0
  %367 = vmatpush1.msra.mxu0 0.0
  %368 = vmatprep.subr.mxu0 0.0
  %369 = vmatpush1.msra.mxu0 0.0
  %370 = vmatprep.subr.mxu0 0.0
  %371 = vmatpush1.msra.mxu0 0.0
  %372 = vmatprep.subr.mxu0 0.0
  %373 = vmatpush1.msra.mxu0 0.0
  %374 = vmatprep.subr.mxu0 0.0
  %375 = vmatpush1.msra.mxu0 0.0
  %376 = vmatprep.subr.mxu0 0.0
  %377 = vmatpush1.msra.mxu0 0.0
  %378 = vmatprep.subr.mxu0 0.0
  %379 = vmatpush1.msra.mxu0 0.0
  %380 = vmatprep.subr.mxu0 0.0
  %381 = vmatpush1.msra.mxu0 0.0
  %382 = vmatprep.subr.mxu0 0.0
  %383 = vmatpush1.msra.mxu0 0.0
  %384 = vmatprep.subr.mxu0 0.0
  %385 = vmatpush1.msra.mxu0 0.0
  %386 = vmatprep.subr.mxu0 0.0
  %387 = vmatpush1.msra.mxu0 0.0
  %388 = vmatprep.subr.mxu0 0.0
  %389 = vmatpush1.msra.mxu0 0.0
  %390 = vmatprep.subr.mxu0 0.0
  %391 = vmatpush1.msra.mxu0 0.0
  %392 = vmatprep.subr.mxu0 0.0
  %393 = vmatpush1.msra.mxu0 0.0
  %394 = vmatprep.subr.mxu0 0.0
  %395 = vmatpush1.msra.mxu0 0.0
  %396 = vmatprep.subr.mxu0 0.0
  %397 = vmatpush1.msra.mxu0 0.0
  %398 = vmatprep.subr.mxu0 0.0
  %399 = vmatpush1.msra.mxu0 0.0
  %400 = vmatprep.subr.mxu0 0.0
  %401 = vmatpush1.msra.mxu0 0.0
  %402 = vmatprep.subr.mxu0 0.0
  %403 = vmatpush1.msra.mxu0 0.0
  %404 = vmatprep.subr.mxu0 0.0
  %405 = vmatpush1.msra.mxu0 0.0
  %406 = vmatprep.subr.mxu0 0.0
  %407 = vmatpush1.msra.mxu0 0.0
  %408 = vmatprep.subr.mxu0 0.0
  %409 = vmatpush1.msra.mxu0 0.0
  %410 = vmatprep.subr.mxu0 0.0
  %411 = vmatpush1.msra.mxu0 0.0
  %412 = vmatprep.subr.mxu0 0.0
  %413 = vmatpush1.msra.mxu0 0.0
  %414 = vmatprep.subr.mxu0 0.0
  %415 = vmatpush1.msra.mxu0 0.0
  %416 = vmatprep.subr.mxu0 0.0
  %417 = vmatpush1.msra.mxu0 0.0
  %418 = vmatprep.subr.mxu0 0.0
  %419 = vmatpush1.msra.mxu0 0.0
  %420 = vmatprep.subr.mxu0 0.0
  %421 = vmatpush1.msra.mxu0 0.0
  %422 = vmatprep.subr.mxu0 0.0
  %423 = vmatpush1.msra.mxu0 0.0
  %424 = vmatprep.subr.mxu0 0.0
  %425 = vmatpush1.msra.mxu0 0.0
  %426 = vmatprep.mubr.f32.mxu0 0.0
  %427 = vmatmul.mubr.f32.gmra.mrb[0].mxu0 %v360
  %v428 = vpop.f32.mrb[0].mxu0
  %v429 = vadd.f32 0.0, %v428
  %v430 = vpop.f32.mrb[0].mxu0
  %431 = vdwg.mxu0
  %432 = vrot.lane.b32.xlu0 %v258, 112
  %v433 = vpop.permute.xlu0 %432
  %434 = vrot.lane.b32.xlu0 %v258, 80
  %v435 = vpop.permute.xlu0 %434
  %v436 = vsel %vm19, %v433, 0
  %v438 = vsel %vm19, %v435, 0
  %440 = vmatprep.subr.mxu0 0.0
  %441 = vmatpush1.xpose.msra.mxu0 %v438
  %442 = vmatprep.subr.mxu0 0.0
  %443 = vmatpush1.xpose.msra.mxu0 0.0
  %444 = vmatprep.subr.mxu0 0.0
  %445 = vmatpush1.xpose.msra.mxu0 0.0
  %446 = vmatprep.subr.mxu0 0.0
  %447 = vmatpush1.xpose.msra.mxu0 0.0
  %448 = vmatprep.subr.mxu0 0.0
  %449 = vmatpush1.xpose.msra.mxu0 0.0
  %450 = vmatprep.subr.mxu0 0.0
  %451 = vmatpush1.xpose.msra.mxu0 0.0
  %452 = vmatprep.subr.mxu0 0.0
  %453 = vmatpush1.xpose.msra.mxu0 0.0
  %454 = vmatprep.subr.mxu0 0.0
  %455 = vmatpush1.xpose.msra.mxu0 0.0
  %456 = vmatprep.subr.mxu0 0.0
  %457 = vmatpush1.xpose.msra.mxu0 0.0
  %458 = vmatprep.subr.mxu0 0.0
  %459 = vmatpush1.xpose.msra.mxu0 0.0
  %460 = vmatprep.subr.mxu0 0.0
  %461 = vmatpush1.xpose.msra.mxu0 0.0
  %462 = vmatprep.subr.mxu0 0.0
  %463 = vmatpush1.xpose.msra.mxu0 0.0
  %464 = vmatprep.subr.mxu0 0.0
  %465 = vmatpush1.xpose.msra.mxu0 0.0
  %466 = vmatprep.subr.mxu0 0.0
  %467 = vmatpush1.xpose.msra.mxu0 0.0
  %468 = vmatprep.subr.mxu0 0.0
  %469 = vmatpush1.xpose.msra.mxu0 0.0
  %470 = vmatprep.subr.mxu0 0.0
  %471 = vmatpush1.xpose.msra.mxu0 0.0
  %472 = vmatprep.subr.mxu0 0.0
  %473 = vmatpush1.xpose.msra.mxu0 0.0
  %474 = vmatprep.subr.mxu0 0.0
  %475 = vmatpush1.xpose.msra.mxu0 0.0
  %476 = vmatprep.subr.mxu0 0.0
  %477 = vmatpush1.xpose.msra.mxu0 0.0
  %478 = vmatprep.subr.mxu0 0.0
  %479 = vmatpush1.xpose.msra.mxu0 0.0
  %480 = vmatprep.subr.mxu0 0.0
  %481 = vmatpush1.xpose.msra.mxu0 0.0
  %482 = vmatprep.subr.mxu0 0.0
  %483 = vmatpush1.xpose.msra.mxu0 0.0
  %484 = vmatprep.subr.mxu0 0.0
  %485 = vmatpush1.xpose.msra.mxu0 0.0
  %486 = vmatprep.subr.mxu0 0.0
  %487 = vmatpush1.xpose.msra.mxu0 0.0
  %488 = vmatprep.subr.mxu0 0.0
  %489 = vmatpush1.xpose.msra.mxu0 0.0
  %490 = vmatprep.subr.mxu0 0.0
  %491 = vmatpush1.xpose.msra.mxu0 0.0
  %492 = vmatprep.subr.mxu0 0.0
  %493 = vmatpush1.xpose.msra.mxu0 0.0
  %494 = vmatprep.subr.mxu0 0.0
  %495 = vmatpush1.xpose.msra.mxu0 0.0
  %496 = vmatprep.subr.mxu0 0.0
  %497 = vmatpush1.xpose.msra.mxu0 0.0
  %498 = vmatprep.subr.mxu0 0.0
  %499 = vmatpush1.xpose.msra.mxu0 0.0
  %500 = vmatprep.subr.mxu0 0.0
  %501 = vmatpush1.xpose.msra.mxu0 0.0
  %502 = vmatprep.subr.mxu0 0.0
  %503 = vmatpush1.xpose.msra.mxu0 0.0
  %504 = vmatprep.mubr.f32.mxu0 0.0
  %505 = vmatmul.mubr.f32.gmra.mrb[0].mxu0 %v436
  %v506 = vpop.f32.mrb[0].mxu0
  %v507 = vadd.f32 0.0, %v506
  %v508 = vpop.f32.mrb[0].mxu0
  %509 = vdwg.mxu0
  %v510 = vmul.f32 %v507, 0.25
  %v511 = vsel %vm344, %v510, -inf
  %512 = vmax.xlane.f32.xlu0 %v511
  %v513 = vpop.xlane.xlu0 %512
  %v514 = vsub.f32 %v510, %v513
  %v515 = vmul.f32 %v514, 1.442695
  %v516 = vpow.pop %v515
  %v517 = vsel %vm344, %v516, 0.0
  %518 = vadd.xlane.f32.xlu0 %v517
  %v519 = vpop.xlane.xlu0 %518
  %v520 = vrcp.pop %v519
  %v521 = vmul.f32 %v516, %v520
  %522 = vrot.lane.b32.xlu0 %v258, 48
  %v523 = vpop.permute.xlu0 %522
  %v526 = vsel %vm344, %v521, 0
  %528 = vmatprep.subr.mxu0 0.0
  %529 = vmatpush1.msra.mxu0 %v523
  %530 = vmatprep.subr.mxu0 0.0
  %531 = vmatpush1.msra.mxu0 0.0
  %532 = vmatprep.subr.mxu0 0.0
  %533 = vmatpush1.msra.mxu0 0.0
  %534 = vmatprep.subr.mxu0 0.0
  %535 = vmatpush1.msra.mxu0 0.0
  %536 = vmatprep.subr.mxu0 0.0
  %537 = vmatpush1.msra.mxu0 0.0
  %538 = vmatprep.subr.mxu0 0.0
  %539 = vmatpush1.msra.mxu0 0.0
  %540 = vmatprep.subr.mxu0 0.0
  %541 = vmatpush1.msra.mxu0 0.0
  %542 = vmatprep.subr.mxu0 0.0
  %543 = vmatpush1.msra.mxu0 0.0
  %544 = vmatprep.subr.mxu0 0.0
  %545 = vmatpush1.msra.mxu0 0.0
  %546 = vmatprep.subr.mxu0 0.0
  %547 = vmatpush1.msra.mxu0 0.0
  %548 = vmatprep.subr.mxu0 0.0
  %549 = vmatpush1.msra.mxu0 0.0
  %550 = vmatprep.subr.mxu0 0.0
  %551 = vmatpush1.msra.mxu0 0.0
  %552 = vmatprep.subr.mxu0 0.0
  %553 = vmatpush1.msra.mxu0 0.0
  %554 = vmatprep.subr.mxu0 0.0
  %555 = vmatpush1.msra.mxu0 0.0
  %556 = vmatprep.subr.mxu0 0.0
  %557 = vmatpush1.msra.mxu0 0.0
  %558 = vmatprep.subr.mxu0 0.0
  %559 = vmatpush1.msra.mxu0 0.0
  %560 = vmatprep.subr.mxu0 0.0
  %561 = vmatpush1.msra.mxu0 0.0
  %562 = vmatprep.subr.mxu0 0.0
  %563 = vmatpush1.msra.mxu0 0.0
  %564 = vmatprep.subr.mxu0 0.0
  %565 = vmatpush1.msra.mxu0 0.0
  %566 = vmatprep.subr.mxu0 0.0
  %567 = vmatpush1.msra.mxu0 0.0
  %568 = vmatprep.subr.mxu0 0.0
  %569 = vmatpush1.msra.mxu0 0.0
  %570 = vmatprep.subr.mxu0 0.0
  %571 = vmatpush1.msra.mxu0 0.0
  %572 = vmatprep.subr.mxu0 0.0
  %573 = vmatpush1.msra.mxu0 0.0
  %574 = vmatprep.subr.mxu0 0.0
  %575 = vmatpush1.msra.mxu0 0.0
  %576 = vmatprep.subr.mxu0 0.0
  %577 = vmatpush1.msra.mxu0 0.0
  %578 = vmatprep.subr.mxu0 0.0
  %579 = vmatpush1.msra.mxu0 0.0
  %580 = vmatprep.subr.mxu0 0.0
  %581 = vmatpush1.msra.mxu0 0.0
  %582 = vmatprep.subr.mxu0 0.0
  %583 = vmatpush1.msra.mxu0 0.0
  %584 = vmatprep.subr.mxu0 0.0
  %585 = vmatpush1.msra.mxu0 0.0
  %586 = vmatprep.subr.mxu0 0.0
  %587 = vmatpush1.msra.mxu0 0.0
  %588 = vmatprep.subr.mxu0 0.0
  %589 = vmatpush1.msra.mxu0 0.0
  %590 = vmatprep.subr.mxu0 0.0
  %591 = vmatpush1.msra.mxu0 0.0
  %592 = vmatprep.mubr.f32.mxu0 0.0
  %593 = vmatmul.mubr.f32.gmra.mrb[0].mxu0 %v526
  %v594 = vpop.f32.mrb[0].mxu0
  %v595 = vadd.f32 0.0, %v594
  %v596 = vpop.f32.mrb[0].mxu0
  %597 = vdwg.mxu0
  %v599 = vsel %vm19, %v595, 0
  %601 = vmatprep.subr.mxu0 0.0
  %602 = vmatpush1.msra.mxu0 %v73
  %603 = vmatprep.subr.mxu0 0.0
  %604 = vmatpush1.msra.mxu0 %v74
  %605 = vmatprep.subr.mxu0 0.0
  %606 = vmatpush1.msra.mxu0 0.0
  %607 = vmatprep.subr.mxu0 0.0
  %608 = vmatpush1.msra.mxu0 0.0
  %609 = vmatprep.subr.mxu0 0.0
  %610 = vmatpush1.msra.mxu0 0.0
  %611 = vmatprep.subr.mxu0 0.0
  %612 = vmatpush1.msra.mxu0 0.0
  %613 = vmatprep.subr.mxu0 0.0
  %614 = vmatpush1.msra.mxu0 0.0
  %615 = vmatprep.subr.mxu0 0.0
  %616 = vmatpush1.msra.mxu0 0.0
  %617 = vmatprep.subr.mxu0 0.0
  %618 = vmatpush1.msra.mxu0 0.0
  %619 = vmatprep.subr.mxu0 0.0
  %620 = vmatpush1.msra.mxu0 0.0
  %621 = vmatprep.subr.mxu0 0.0
  %622 = vmatpush1.msra.mxu0 0.0
  %623 = vmatprep.subr.mxu0 0.0
  %624 = vmatpush1.msra.mxu0 0.0
  %625 = vmatprep.subr.mxu0 0.0
  %626 = vmatpush1.msra.mxu0 0.0
  %627 = vmatprep.subr.mxu0 0.0
  %628 = vmatpush1.msra.mxu0 0.0
  %629 = vmatprep.subr.mxu0 0.0
  %630 = vmatpush1.msra.mxu0 0.0
  %631 = vmatprep.subr.mxu0 0.0
  %632 = vmatpush1.msra.mxu0 0.0
  %633 = vmatprep.subr.mxu0 0.0
  %634 = vmatpush1.msra.mxu0 0.0
  %635 = vmatprep.subr.mxu0 0.0
  %636 = vmatpush1.msra.mxu0 0.0
  %637 = vmatprep.subr.mxu0 0.0
  %638 = vmatpush1.msra.mxu0 0.0
  %639 = vmatprep.subr.mxu0 0.0
  %640 = vmatpush1.msra.mxu0 0.0
  %641 = vmatprep.subr.mxu0 0.0
  %642 = vmatpush1.msra.mxu0 0.0
  %643 = vmatprep.subr.mxu0 0.0
  %644 = vmatpush1.msra.mxu0 0.0
  %645 = vmatprep.subr.mxu0 0.0
  %646 = vmatpush1.msra.mxu0 0.0
  %647 = vmatprep.subr.mxu0 0.0
  %648 = vmatpush1.msra.mxu0 0.0
  %649 = vmatprep.subr.mxu0 0.0
  %650 = vmatpush1.msra.mxu0 0.0
  %651 = vmatprep.subr.mxu0 0.0
  %652 = vmatpush1.msra.mxu0 0.0
  %653 = vmatprep.subr.mxu0 0.0
  %654 = vmatpush1.msra.mxu0 0.0
  %655 = vmatprep.subr.mxu0 0.0
  %656 = vmatpush1.msra.mxu0 0.0
  %657 = vmatprep.subr.mxu0 0.0
  %658 = vmatpush1.msra.mxu0 0.0
  %659 = vmatprep.subr.mxu0 0.0
  %660 = vmatpush1.msra.mxu0 0.0
  %661 = vmatprep.subr.mxu0 0.0
  %662 = vmatpush1.msra.mxu0 0.0
  %663 = vmatprep.subr.mxu0 0.0
  %664 = vmatpush1.msra.mxu0 0.0
  %665 = vmatprep.mubr.f32.mxu0 0.0
  %666 = vmatmul.mubr.f32.gmra.mrb[0].mxu0 %v599
  %v667 = vpop.f32.mrb[0].mxu0
  %v668 = vadd.f32 0.0, %v667
  %v669 = vpop.f32.mrb[0].mxu0
  %670 = vdwg.mxu0
  %v672 = vsel %vm19, %v429, 0
  %674 = vmatprep.subr.mxu0 0.0
  %675 = vmatpush1.msra.mxu0 %v71
  %676 = vmatprep.subr.mxu0 0.0
  %677 = vmatpush1.msra.mxu0 %v72
  %678 = vmatprep.subr.mxu0 0.0
  %679 = vmatpush1.msra.mxu0 0.0
  %680 = vmatprep.subr.mxu0 0.0
  %681 = vmatpush1.msra.mxu0 0.0
  %682 = vmatprep.subr.mxu0 0.0
  %683 = vmatpush1.msra.mxu0 0.0
  %684 = vmatprep.subr.mxu0 0.0
  %685 = vmatpush1.msra.mxu0 0.0
  %686 = vmatprep.subr.mxu0 0.0
  %687 = vmatpush1.msra.mxu0 0.0
  %688 = vmatprep.subr.mxu0 0.0
  %689 = vmatpush1.msra.mxu0 0.0
  %690 = vmatprep.subr.mxu0 0.0
  %691 = vmatpush1.msra.mxu0 0.0
  %692 = vmatprep.subr.mxu0 0.0
  %693 = vmatpush1.msra.mxu0 0.0
  %694 = vmatprep.subr.mxu0 0.0
  %695 = vmatpush1.msra.mxu0 0.0
  %696 = vmatprep.subr.mxu0 0.0
  %697 = vmatpush1.msra.mxu0 0.0
  %698 = vmatprep.subr.mxu0 0.0
  %699 = vmatpush1.msra.mxu0 0.0
  %700 = vmatprep.subr.mxu0 0.0
  %701 = vmatpush1.msra.mxu0 0.0
  %702 = vmatprep.subr.mxu0 0.0
  %703 = vmatpush1.msra.mxu0 0.0
  %704 = vmatprep.subr.mxu0 0.0
  %705 = vmatpush1.msra.mxu0 0.0
  %706 = vmatprep.subr.mxu0 0.0
  %707 = vmatpush1.msra.mxu0 0.0
  %708 = vmatprep.subr.mxu0 0.0
  %709 = vmatpush1.msra.mxu0 0.0
  %710 = vmatprep.subr.mxu0 0.0
  %711 = vmatpush1.msra.mxu0 0.0
  %712 = vmatprep.subr.mxu0 0.0
  %713 = vmatpush1.msra.mxu0 0.0
  %714 = vmatprep.subr.mxu0 0.0
  %715 = vmatpush1.msra.mxu0 0.0
  %716 = vmatprep.subr.mxu0 0.0
  %717 = vmatpush1.msra.mxu0 0.0
  %718 = vmatprep.subr.mxu0 0.0
  %719 = vmatpush1.msra.mxu0 0.0
  %720 = vmatprep.subr.mxu0 0.0
  %721 = vmatpush1.msra.mxu0 0.0
  %722 = vmatprep.subr.mxu0 0.0
  %723 = vmatpush1.msra.mxu0 0.0
  %724 = vmatprep.subr.mxu0 0.0
  %725 = vmatpush1.msra.mxu0 0.0
  %726 = vmatprep.subr.mxu0 0.0
  %727 = vmatpush1.msra.mxu0 0.0
  %728 = vmatprep.subr.mxu0 0.0
  %729 = vmatpush1.msra.mxu0 0.0
  %730 = vmatprep.subr.mxu0 0.0
  %731 = vmatpush1.msra.mxu0 0.0
  %732 = vmatprep.subr.mxu0 0.0
  %733 = vmatpush1.msra.mxu0 0.0
  %734 = vmatprep.subr.mxu0 0.0
  %735 = vmatpush1.msra.mxu0 0.0
  %736 = vmatprep.subr.mxu0 0.0
  %737 = vmatpush1.msra.mxu0 0.0
  %738 = vmatprep.mubr.f32.mxu0 0.0
  %739 = vmatmul.mubr.f32.gmra.mrb[0].mxu0 %v672
  %v740 = vpop.f32.mrb[0].mxu0
  %v741 = vadd.f32 %v668, %v740
  %v742 = vpop.f32.mrb[0].mxu0
  %743 = vdwg.mxu0
  %745 = vrot.lane.b32.xlu0 %v263, 96
  %v746 = vpop.permute.xlu0 %745
  %v747 = vsel %vm19, %v263, 0
  %v749 = vsel %vm19, %v746, 0
  %751 = vmatprep.subr.mxu0 0.0
  %752 = vmatpush1.xpose.msra.mxu0 %v749
  %753 = vmatprep.subr.mxu0 0.0
  %754 = vmatpush1.xpose.msra.mxu0 0.0
  %755 = vmatprep.subr.mxu0 0.0
  %756 = vmatpush1.xpose.msra.mxu0 0.0
  %757 = vmatprep.subr.mxu0 0.0
  %758 = vmatpush1.xpose.msra.mxu0 0.0
  %759 = vmatprep.subr.mxu0 0.0
  %760 = vmatpush1.xpose.msra.mxu0 0.0
  %761 = vmatprep.subr.mxu0 0.0
  %762 = vmatpush1.xpose.msra.mxu0 0.0
  %763 = vmatprep.subr.mxu0 0.0
  %764 = vmatpush1.xpose.msra.mxu0 0.0
  %765 = vmatprep.subr.mxu0 0.0
  %766 = vmatpush1.xpose.msra.mxu0 0.0
  %767 = vmatprep.subr.mxu0 0.0
  %768 = vmatpush1.xpose.msra.mxu0 0.0
  %769 = vmatprep.subr.mxu0 0.0
  %770 = vmatpush1.xpose.msra.mxu0 0.0
  %771 = vmatprep.subr.mxu0 0.0
  %772 = vmatpush1.xpose.msra.mxu0 0.0
  %773 = vmatprep.subr.mxu0 0.0
  %774 = vmatpush1.xpose.msra.mxu0 0.0
  %775 = vmatprep.subr.mxu0 0.0
  %776 = vmatpush1.xpose.msra.mxu0 0.0
  %777 = vmatprep.subr.mxu0 0.0
  %778 = vmatpush1.xpose.msra.mxu0 0.0
  %779 = vmatprep.subr.mxu0 0.0
  %780 = vmatpush1.xpose.msra.mxu0 0.0
  %781 = vmatprep.subr.mxu0 0.0
  %782 = vmatpush1.xpose.msra.mxu0 0.0
  %783 = vmatprep.subr.mxu0 0.0
  %784 = vmatpush1.xpose.msra.mxu0 0.0
  %785 = vmatprep.subr.mxu0 0.0
  %786 = vmatpush1.xpose.msra.mxu0 0.0
  %787 = vmatprep.subr.mxu0 0.0
  %788 = vmatpush1.xpose.msra.mxu0 0.0
  %789 = vmatprep.subr.mxu0 0.0
  %790 = vmatpush1.xpose.msra.mxu0 0.0
  %791 = vmatprep.subr.mxu0 0.0
  %792 = vmatpush1.xpose.msra.mxu0 0.0
  %793 = vmatprep.subr.mxu0 0.0
  %794 = vmatpush1.xpose.msra.mxu0 0.0
  %795 = vmatprep.subr.mxu0 0.0
  %796 = vmatpush1.xpose.msra.mxu0 0.0
  %797 = vmatprep.subr.mxu0 0.0
  %798 = vmatpush1.xpose.msra.mxu0 0.0
  %799 = vmatprep.subr.mxu0 0.0
  %800 = vmatpush1.xpose.msra.mxu0 0.0
  %801 = vmatprep.subr.mxu0 0.0
  %802 = vmatpush1.xpose.msra.mxu0 0.0
  %803 = vmatprep.subr.mxu0 0.0
  %804 = vmatpush1.xpose.msra.mxu0 0.0
  %805 = vmatprep.subr.mxu0 0.0
  %806 = vmatpush1.xpose.msra.mxu0 0.0
  %807 = vmatprep.subr.mxu0 0.0
  %808 = vmatpush1.xpose.msra.mxu0 0.0
  %809 = vmatprep.subr.mxu0 0.0
  %810 = vmatpush1.xpose.msra.mxu0 0.0
  %811 = vmatprep.subr.mxu0 0.0
  %812 = vmatpush1.xpose.msra.mxu0 0.0
  %813 = vmatprep.subr.mxu0 0.0
  %814 = vmatpush1.xpose.msra.mxu0 0.0
  %815 = vmatprep.mubr.f32.mxu0 0.0
  %816 = vmatmul.mubr.f32.gmra.mrb[0].mxu0 %v747
  %v817 = vpop.f32.mrb[0].mxu0
  %v818 = vadd.f32 0.0, %v817
  %v819 = vpop.f32.mrb[0].mxu0
  %820 = vdwg.mxu0
  %v821 = vmul.f32 %v818, 0.25
  %v822 = vsel %vm344, %v821, -inf
  %823 = vmax.xlane.f32.xlu0 %v822
  %v824 = vpop.xlane.xlu0 %823
  %v825 = vsub.f32 %v821, %v824
  %v826 = vmul.f32 %v825, 1.442695
  %v827 = vpow.pop %v826
  %v828 = vsel %vm344, %v827, 0.0
  %829 = vadd.xlane.f32.xlu0 %v828
  %v830 = vpop.xlane.xlu0 %829
  %v831 = vrcp.pop %v830
  %v832 = vmul.f32 %v827, %v831
  %833 = vrot.lane.b32.xlu0 %v263, 64
  %v834 = vpop.permute.xlu0 %833
  %v837 = vsel %vm344, %v832, 0
  %839 = vmatprep.subr.mxu0 0.0
  %840 = vmatpush1.msra.mxu0 %v834
  %841 = vmatprep.subr.mxu0 0.0
  %842 = vmatpush1.msra.mxu0 0.0
  %843 = vmatprep.subr.mxu0 0.0
  %844 = vmatpush1.msra.mxu0 0.0
  %845 = vmatprep.subr.mxu0 0.0
  %846 = vmatpush1.msra.mxu0 0.0
  %847 = vmatprep.subr.mxu0 0.0
  %848 = vmatpush1.msra.mxu0 0.0
  %849 = vmatprep.subr.mxu0 0.0
  %850 = vmatpush1.msra.mxu0 0.0
  %851 = vmatprep.subr.mxu0 0.0
  %852 = vmatpush1.msra.mxu0 0.0
  %853 = vmatprep.subr.mxu0 0.0
  %854 = vmatpush1.msra.mxu0 0.0
  %855 = vmatprep.subr.mxu0 0.0
  %856 = vmatpush1.msra.mxu0 0.0
  %857 = vmatprep.subr.mxu0 0.0
  %858 = vmatpush1.msra.mxu0 0.0
  %859 = vmatprep.subr.mxu0 0.0
  %860 = vmatpush1.msra.mxu0 0.0
  %861 = vmatprep.subr.mxu0 0.0
  %862 = vmatpush1.msra.mxu0 0.0
  %863 = vmatprep.subr.mxu0 0.0
  %864 = vmatpush1.msra.mxu0 0.0
  %865 = vmatprep.subr.mxu0 0.0
  %866 = vmatpush1.msra.mxu0 0.0
  %867 = vmatprep.subr.mxu0 0.0
  %868 = vmatpush1.msra.mxu0 0.0
  %869 = vmatprep.subr.mxu0 0.0
  %870 = vmatpush1.msra.mxu0 0.0
  %871 = vmatprep.subr.mxu0 0.0
  %872 = vmatpush1.msra.mxu0 0.0
  %873 = vmatprep.subr.mxu0 0.0
  %874 = vmatpush1.msra.mxu0 0.0
  %875 = vmatprep.subr.mxu0 0.0
  %876 = vmatpush1.msra.mxu0 0.0
  %877 = vmatprep.subr.mxu0 0.0
  %878 = vmatpush1.msra.mxu0 0.0
  %879 = vmatprep.subr.mxu0 0.0
  %880 = vmatpush1.msra.mxu0 0.0
  %881 = vmatprep.subr.mxu0 0.0
  %882 = vmatpush1.msra.mxu0 0.0
  %883 = vmatprep.subr.mxu0 0.0
  %884 = vmatpush1.msra.mxu0 0.0
  %885 = vmatprep.subr.mxu0 0.0
  %886 = vmatpush1.msra.mxu0 0.0
  %887 = vmatprep.subr.mxu0 0.0
  %888 = vmatpush1.msra.mxu0 0.0
  %889 = vmatprep.subr.mxu0 0.0
  %890 = vmatpush1.msra.mxu0 0.0
  %891 = vmatprep.subr.mxu0 0.0
  %892 = vmatpush1.msra.mxu0 0.0
  %893 = vmatprep.subr.mxu0 0.0
  %894 = vmatpush1.msra.mxu0 0.0
  %895 = vmatprep.subr.mxu0 0.0
  %896 = vmatpush1.msra.mxu0 0.0
  %897 = vmatprep.subr.mxu0 0.0
  %898 = vmatpush1.msra.mxu0 0.0
  %899 = vmatprep.subr.mxu0 0.0
  %900 = vmatpush1.msra.mxu0 0.0
  %901 = vmatprep.subr.mxu0 0.0
  %902 = vmatpush1.msra.mxu0 0.0
  %903 = vmatprep.mubr.f32.mxu0 0.0
  %904 = vmatmul.mubr.f32.gmra.mrb[0].mxu0 %v837
  %v905 = vpop.f32.mrb[0].mxu0
  %v906 = vadd.f32 0.0, %v905
  %v907 = vpop.f32.mrb[0].mxu0
  %908 = vdwg.mxu0
  %909 = vrot.lane.b32.xlu0 %v263, 112
  %v910 = vpop.permute.xlu0 %909
  %911 = vrot.lane.b32.xlu0 %v263, 80
  %v912 = vpop.permute.xlu0 %911
  %v913 = vsel %vm19, %v910, 0
  %v915 = vsel %vm19, %v912, 0
  %917 = vmatprep.subr.mxu0 0.0
  %918 = vmatpush1.xpose.msra.mxu0 %v915
  %919 = vmatprep.subr.mxu0 0.0
  %920 = vmatpush1.xpose.msra.mxu0 0.0
  %921 = vmatprep.subr.mxu0 0.0
  %922 = vmatpush1.xpose.msra.mxu0 0.0
  %923 = vmatprep.subr.mxu0 0.0
  %924 = vmatpush1.xpose.msra.mxu0 0.0
  %925 = vmatprep.subr.mxu0 0.0
  %926 = vmatpush1.xpose.msra.mxu0 0.0
  %927 = vmatprep.subr.mxu0 0.0
  %928 = vmatpush1.xpose.msra.mxu0 0.0
  %929 = vmatprep.subr.mxu0 0.0
  %930 = vmatpush1.xpose.msra.mxu0 0.0
  %931 = vmatprep.subr.mxu0 0.0
  %932 = vmatpush1.xpose.msra.mxu0 0.0
  %933 = vmatprep.subr.mxu0 0.0
  %934 = vmatpush1.xpose.msra.mxu0 0.0
  %935 = vmatprep.subr.mxu0 0.0
  %936 = vmatpush1.xpose.msra.mxu0 0.0
  %937 = vmatprep.subr.mxu0 0.0
  %938 = vmatpush1.xpose.msra.mxu0 0.0
  %939 = vmatprep.subr.mxu0 0.0
  %940 = vmatpush1.xpose.msra.mxu0 0.0
  %941 = vmatprep.subr.mxu0 0.0
  %942 = vmatpush1.xpose.msra.mxu0 0.0
  %943 = vmatprep.subr.mxu0 0.0
  %944 = vmatpush1.xpose.msra.mxu0 0.0
  %945 = vmatprep.subr.mxu0 0.0
  %946 = vmatpush1.xpose.msra.mxu0 0.0
  %947 = vmatprep.subr.mxu0 0.0
  %948 = vmatpush1.xpose.msra.mxu0 0.0
  %949 = vmatprep.subr.mxu0 0.0
  %950 = vmatpush1.xpose.msra.mxu0 0.0
  %951 = vmatprep.subr.mxu0 0.0
  %952 = vmatpush1.xpose.msra.mxu0 0.0
  %953 = vmatprep.subr.mxu0 0.0
  %954 = vmatpush1.xpose.msra.mxu0 0.0
  %955 = vmatprep.subr.mxu0 0.0
  %956 = vmatpush1.xpose.msra.mxu0 0.0
  %957 = vmatprep.subr.mxu0 0.0
  %958 = vmatpush1.xpose.msra.mxu0 0.0
  %959 = vmatprep.subr.mxu0 0.0
  %960 = vmatpush1.xpose.msra.mxu0 0.0
  %961 = vmatprep.subr.mxu0 0.0
  %962 = vmatpush1.xpose.msra.mxu0 0.0
  %963 = vmatprep.subr.mxu0 0.0
  %964 = vmatpush1.xpose.msra.mxu0 0.0
  %965 = vmatprep.subr.mxu0 0.0
  %966 = vmatpush1.xpose.msra.mxu0 0.0
  %967 = vmatprep.subr.mxu0 0.0
  %968 = vmatpush1.xpose.msra.mxu0 0.0
  %969 = vmatprep.subr.mxu0 0.0
  %970 = vmatpush1.xpose.msra.mxu0 0.0
  %971 = vmatprep.subr.mxu0 0.0
  %972 = vmatpush1.xpose.msra.mxu0 0.0
  %973 = vmatprep.subr.mxu0 0.0
  %974 = vmatpush1.xpose.msra.mxu0 0.0
  %975 = vmatprep.subr.mxu0 0.0
  %976 = vmatpush1.xpose.msra.mxu0 0.0
  %977 = vmatprep.subr.mxu0 0.0
  %978 = vmatpush1.xpose.msra.mxu0 0.0
  %979 = vmatprep.subr.mxu0 0.0
  %980 = vmatpush1.xpose.msra.mxu0 0.0
  %981 = vmatprep.mubr.f32.mxu0 0.0
  %982 = vmatmul.mubr.f32.gmra.mrb[0].mxu0 %v913
  %v983 = vpop.f32.mrb[0].mxu0
  %v984 = vadd.f32 0.0, %v983
  %v985 = vpop.f32.mrb[0].mxu0
  %986 = vdwg.mxu0
  %v987 = vmul.f32 %v984, 0.25
  %v988 = vsel %vm344, %v987, -inf
  %989 = vmax.xlane.f32.xlu0 %v988
  %v990 = vpop.xlane.xlu0 %989
  %v991 = vsub.f32 %v987, %v990
  %v992 = vmul.f32 %v991, 1.442695
  %v993 = vpow.pop %v992
  %v994 = vsel %vm344, %v993, 0.0
  %995 = vadd.xlane.f32.xlu0 %v994
  %v996 = vpop.xlane.xlu0 %995
  %v997 = vrcp.pop %v996
  %v998 = vmul.f32 %v993, %v997
  %999 = vrot.lane.b32.xlu0 %v263, 48
  %v1000 = vpop.permute.xlu0 %999
  %v1003 = vsel %vm344, %v998, 0
  %1005 = vmatprep.subr.mxu0 0.0
  %1006 = vmatpush1.msra.mxu0 %v1000
  %1007 = vmatprep.subr.mxu0 0.0
  %1008 = vmatpush1.msra.mxu0 0.0
  %1009 = vmatprep.subr.mxu0 0.0
  %1010 = vmatpush1.msra.mxu0 0.0
  %1011 = vmatprep.subr.mxu0 0.0
  %1012 = vmatpush1.msra.mxu0 0.0
  %1013 = vmatprep.subr.mxu0 0.0
  %1014 = vmatpush1.msra.mxu0 0.0
  %1015 = vmatprep.subr.mxu0 0.0
  %1016 = vmatpush1.msra.mxu0 0.0
  %1017 = vmatprep.subr.mxu0 0.0
  %1018 = vmatpush1.msra.mxu0 0.0
  %1019 = vmatprep.subr.mxu0 0.0
  %1020 = vmatpush1.msra.mxu0 0.0
  %1021 = vmatprep.subr.mxu0 0.0
  %1022 = vmatpush1.msra.mxu0 0.0
  %1023 = vmatprep.subr.mxu0 0.0
  %1024 = vmatpush1.msra.mxu0 0.0
  %1025 = vmatprep.subr.mxu0 0.0
  %1026 = vmatpush1.msra.mxu0 0.0
  %1027 = vmatprep.subr.mxu0 0.0
  %1028 = vmatpush1.msra.mxu0 0.0
  %1029 = vmatprep.subr.mxu0 0.0
  %1030 = vmatpush1.msra.mxu0 0.0
  %1031 = vmatprep.subr.mxu0 0.0
  %1032 = vmatpush1.msra.mxu0 0.0
  %1033 = vmatprep.subr.mxu0 0.0
  %1034 = vmatpush1.msra.mxu0 0.0
  %1035 = vmatprep.subr.mxu0 0.0
  %1036 = vmatpush1.msra.mxu0 0.0
  %1037 = vmatprep.subr.mxu0 0.0
  %1038 = vmatpush1.msra.mxu0 0.0
  %1039 = vmatprep.subr.mxu0 0.0
  %1040 = vmatpush1.msra.mxu0 0.0
  %1041 = vmatprep.subr.mxu0 0.0
  %1042 = vmatpush1.msra.mxu0 0.0
  %1043 = vmatprep.subr.mxu0 0.0
  %1044 = vmatpush1.msra.mxu0 0.0
  %1045 = vmatprep.subr.mxu0 0.0
  %1046 = vmatpush1.msra.mxu0 0.0
  %1047 = vmatprep.subr.mxu0 0.0
  %1048 = vmatpush1.msra.mxu0 0.0
  %1049 = vmatprep.subr.mxu0 0.0
  %1050 = vmatpush1.msra.mxu0 0.0
  %1051 = vmatprep.subr.mxu0 0.0
  %1052 = vmatpush1.msra.mxu0 0.0
  %1053 = vmatprep.subr.mxu0 0.0
  %1054 = vmatpush1.msra.mxu0 0.0
  %1055 = vmatprep.subr.mxu0 0.0
  %1056 = vmatpush1.msra.mxu0 0.0
  %1057 = vmatprep.subr.mxu0 0.0
  %1058 = vmatpush1.msra.mxu0 0.0
  %1059 = vmatprep.subr.mxu0 0.0
  %1060 = vmatpush1.msra.mxu0 0.0
  %1061 = vmatprep.subr.mxu0 0.0
  %1062 = vmatpush1.msra.mxu0 0.0
  %1063 = vmatprep.subr.mxu0 0.0
  %1064 = vmatpush1.msra.mxu0 0.0
  %1065 = vmatprep.subr.mxu0 0.0
  %1066 = vmatpush1.msra.mxu0 0.0
  %1067 = vmatprep.subr.mxu0 0.0
  %1068 = vmatpush1.msra.mxu0 0.0
  %1069 = vmatprep.mubr.f32.mxu0 0.0
  %1070 = vmatmul.mubr.f32.gmra.mrb[0].mxu0 %v1003
  %v1071 = vpop.f32.mrb[0].mxu0
  %v1072 = vadd.f32 0.0, %v1071
  %v1073 = vpop.f32.mrb[0].mxu0
  %1074 = vdwg.mxu0
  %v1076 = vsel %vm19, %v1072, 0
  %1078 = vmatprep.subr.mxu0 0.0
  %1079 = vmatpush1.msra.mxu0 %v73
  %1080 = vmatprep.subr.mxu0 0.0
  %1081 = vmatpush1.msra.mxu0 %v74
  %1082 = vmatprep.subr.mxu0 0.0
  %1083 = vmatpush1.msra.mxu0 0.0
  %1084 = vmatprep.subr.mxu0 0.0
  %1085 = vmatpush1.msra.mxu0 0.0
  %1086 = vmatprep.subr.mxu0 0.0
  %1087 = vmatpush1.msra.mxu0 0.0
  %1088 = vmatprep.subr.mxu0 0.0
  %1089 = vmatpush1.msra.mxu0 0.0
  %1090 = vmatprep.subr.mxu0 0.0
  %1091 = vmatpush1.msra.mxu0 0.0
  %1092 = vmatprep.subr.mxu0 0.0
  %1093 = vmatpush1.msra.mxu0 0.0
  %1094 = vmatprep.subr.mxu0 0.0
  %1095 = vmatpush1.msra.mxu0 0.0
  %1096 = vmatprep.subr.mxu0 0.0
  %1097 = vmatpush1.msra.mxu0 0.0
  %1098 = vmatprep.subr.mxu0 0.0
  %1099 = vmatpush1.msra.mxu0 0.0
  %1100 = vmatprep.subr.mxu0 0.0
  %1101 = vmatpush1.msra.mxu0 0.0
  %1102 = vmatprep.subr.mxu0 0.0
  %1103 = vmatpush1.msra.mxu0 0.0
  %1104 = vmatprep.subr.mxu0 0.0
  %1105 = vmatpush1.msra.mxu0 0.0
  %1106 = vmatprep.subr.mxu0 0.0
  %1107 = vmatpush1.msra.mxu0 0.0
  %1108 = vmatprep.subr.mxu0 0.0
  %1109 = vmatpush1.msra.mxu0 0.0
  %1110 = vmatprep.subr.mxu0 0.0
  %1111 = vmatpush1.msra.mxu0 0.0
  %1112 = vmatprep.subr.mxu0 0.0
  %1113 = vmatpush1.msra.mxu0 0.0
  %1114 = vmatprep.subr.mxu0 0.0
  %1115 = vmatpush1.msra.mxu0 0.0
  %1116 = vmatprep.subr.mxu0 0.0
  %1117 = vmatpush1.msra.mxu0 0.0
  %1118 = vmatprep.subr.mxu0 0.0
  %1119 = vmatpush1.msra.mxu0 0.0
  %1120 = vmatprep.subr.mxu0 0.0
  %1121 = vmatpush1.msra.mxu0 0.0
  %1122 = vmatprep.subr.mxu0 0.0
  %1123 = vmatpush1.msra.mxu0 0.0
  %1124 = vmatprep.subr.mxu0 0.0
  %1125 = vmatpush1.msra.mxu0 0.0
  %1126 = vmatprep.subr.mxu0 0.0
  %1127 = vmatpush1.msra.mxu0 0.0
  %1128 = vmatprep.subr.mxu0 0.0
  %1129 = vmatpush1.msra.mxu0 0.0
  %1130 = vmatprep.subr.mxu0 0.0
  %1131 = vmatpush1.msra.mxu0 0.0
  %1132 = vmatprep.subr.mxu0 0.0
  %1133 = vmatpush1.msra.mxu0 0.0
  %1134 = vmatprep.subr.mxu0 0.0
  %1135 = vmatpush1.msra.mxu0 0.0
  %1136 = vmatprep.subr.mxu0 0.0
  %1137 = vmatpush1.msra.mxu0 0.0
  %1138 = vmatprep.subr.mxu0 0.0
  %1139 = vmatpush1.msra.mxu0 0.0
  %1140 = vmatprep.subr.mxu0 0.0
  %1141 = vmatpush1.msra.mxu0 0.0
  %1142 = vmatprep.mubr.f32.mxu0 0.0
  %1143 = vmatmul.mubr.f32.gmra.mrb[0].mxu0 %v1076
  %v1144 = vpop.f32.mrb[0].mxu0
  %v1145 = vadd.f32 0.0, %v1144
  %v1146 = vpop.f32.mrb[0].mxu0
  %1147 = vdwg.mxu0
  %v1149 = vsel %vm19, %v906, 0
  %1151 = vmatprep.subr.mxu0 0.0
  %1152 = vmatpush1.msra.mxu0 %v71
  %1153 = vmatprep.subr.mxu0 0.0
  %1154 = vmatpush1.msra.mxu0 %v72
  %1155 = vmatprep.subr.mxu0 0.0
  %1156 = vmatpush1.msra.mxu0 0.0
  %1157 = vmatprep.subr.mxu0 0.0
  %1158 = vmatpush1.msra.mxu0 0.0
  %1159 = vmatprep.subr.mxu0 0.0
  %1160 = vmatpush1.msra.mxu0 0.0
  %1161 = vmatprep.subr.mxu0 0.0
  %1162 = vmatpush1.msra.mxu0 0.0
  %1163 = vmatprep.subr.mxu0 0.0
  %1164 = vmatpush1.msra.mxu0 0.0
  %1165 = vmatprep.subr.mxu0 0.0
  %1166 = vmatpush1.msra.mxu0 0.0
  %1167 = vmatprep.subr.mxu0 0.0
  %1168 = vmatpush1.msra.mxu0 0.0
  %1169 = vmatprep.subr.mxu0 0.0
  %1170 = vmatpush1.msra.mxu0 0.0
  %1171 = vmatprep.subr.mxu0 0.0
  %1172 = vmatpush1.msra.mxu0 0.0
  %1173 = vmatprep.subr.mxu0 0.0
  %1174 = vmatpush1.msra.mxu0 0.0
  %1175 = vmatprep.subr.mxu0 0.0
  %1176 = vmatpush1.msra.mxu0 0.0
  %1177 = vmatprep.subr.mxu0 0.0
  %1178 = vmatpush1.msra.mxu0 0.0
  %1179 = vmatprep.subr.mxu0 0.0
  %1180 = vmatpush1.msra.mxu0 0.0
  %1181 = vmatprep.subr.mxu0 0.0
  %1182 = vmatpush1.msra.mxu0 0.0
  %1183 = vmatprep.subr.mxu0 0.0
  %1184 = vmatpush1.msra.mxu0 0.0
  %1185 = vmatprep.subr.mxu0 0.0
  %1186 = vmatpush1.msra.mxu0 0.0
  %1187 = vmatprep.subr.mxu0 0.0
  %1188 = vmatpush1.msra.mxu0 0.0
  %1189 = vmatprep.subr.mxu0 0.0
  %1190 = vmatpush1.msra.mxu0 0.0
  %1191 = vmatprep.subr.mxu0 0.0
  %1192 = vmatpush1.msra.mxu0 0.0
  %1193 = vmatprep.subr.mxu0 0.0
  %1194 = vmatpush1.msra.mxu0 0.0
  %1195 = vmatprep.subr.mxu0 0.0
  %1196 = vmatpush1.msra.mxu0 0.0
  %1197 = vmatprep.subr.mxu0 0.0
  %1198 = vmatpush1.msra.mxu0 0.0
  %1199 = vmatprep.subr.mxu0 0.0
  %1200 = vmatpush1.msra.mxu0 0.0
  %1201 = vmatprep.subr.mxu0 0.0
  %1202 = vmatpush1.msra.mxu0 0.0
  %1203 = vmatprep.subr.mxu0 0.0
  %1204 = vmatpush1.msra.mxu0 0.0
  %1205 = vmatprep.subr.mxu0 0.0
  %1206 = vmatpush1.msra.mxu0 0.0
  %1207 = vmatprep.subr.mxu0 0.0
  %1208 = vmatpush1.msra.mxu0 0.0
  %1209 = vmatprep.subr.mxu0 0.0
  %1210 = vmatpush1.msra.mxu0 0.0
  %1211 = vmatprep.subr.mxu0 0.0
  %1212 = vmatpush1.msra.mxu0 0.0
  %1213 = vmatprep.subr.mxu0 0.0
  %1214 = vmatpush1.msra.mxu0 0.0
  %1215 = vmatprep.mubr.f32.mxu0 0.0
  %1216 = vmatmul.mubr.f32.gmra.mrb[0].mxu0 %v1149
  %v1217 = vpop.f32.mrb[0].mxu0
  %v1218 = vadd.f32 %v1145, %v1217
  %v1219 = vpop.f32.mrb[0].mxu0
  %1220 = vdwg.mxu0
  %v1221 = vlaneseq
  %v1222 = vshrl.u32 %v1221, 7
  %v1223 = vsub.s32 0, %v1222
  %v1224 = vrot.slane %v85, %v1223
  %v1225 = vadd.f32 %v741, %v1224
  %v1226 = vadd.f32 %v1218, %v1224
  %v1227 = vadd.f32 %v172, %v1225
  %v1228 = vadd.f32 %v177, %v1226
  %v1229 = vsel %vm184, %v1227, 0.0
  %1230 = vadd.xlane.f32.xlu0 %v1229
  %v1231 = vpop.xlane.xlu0 %1230
  %v1232 = vsel %vm184, %v1228, 0.0
  %1233 = vadd.xlane.f32.xlu0 %v1232
  %v1234 = vpop.xlane.xlu0 %1233
  %v1235 = vrcp.pop 32.0
  %v1236 = vmul.f32 %v1231, %v1235
  %v1237 = vmul.f32 %v1234, %v1235
  %v1238 = vsub.f32 %v1227, %v1236
  %v1239 = vsub.f32 %v1228, %v1237
  %v1240 = vmul.f32 %v1238, %v1238
  %v1241 = vmul.f32 %v1239, %v1239
  %v1242 = vsel %vm184, %v1240, 0.0
  %1243 = vadd.xlane.f32.xlu0 %v1242
  %v1244 = vpop.xlane.xlu0 %1243
  %v1245 = vsel %vm184, %v1241, 0.0
  %1246 = vadd.xlane.f32.xlu0 %v1245
  %v1247 = vpop.xlane.xlu0 %1246
  %v1248 = vmul.f32 %v1244, %v1235
  %v1249 = vmul.f32 %v1247, %v1235
  %v1250 = vadd.f32 %v1248, 1e-05
  %v1251 = vadd.f32 %v1249, 1e-05
  %v1252 = vrsqrt.pop %v1250
  %v1253 = vrsqrt.pop %v1251
  %v1254 = vmul.f32 %v1238, %v1252
  %v1255 = vmul.f32 %v1239, %v1253
  %v1256 = vlaneseq
  %v1257 = vshrl.u32 %v1256, 7
  %v1258 = vsub.s32 0, %v1257
  %v1259 = vrot.slane %v86, %v1258
  %v1260 = vmul.f32 %v1254, %v1259
  %v1261 = vmul.f32 %v1255, %v1259
  %v1262 = vlaneseq
  %v1263 = vshrl.u32 %v1262, 7
  %v1264 = vsub.s32 0, %v1263
  %v1265 = vrot.slane %v87, %v1264
  %v1266 = vadd.f32 %v1260, %v1265
  %v1267 = vadd.f32 %v1261, %v1265
  %v1268 = vlaneseq
  %v1269 = vshrl.u32 %v1268, 7
  %v1270 = vsub.s32 0, %v1269
  %v1271 = vrot.slane %v88, %v1270
  %v1273 = vsel %vm184, %v1266, 0
  %v1276 = vsel %vm184, %v1267, 0
  %1278 = vmatprep.subr.mxu0 0.0
  %1279 = vmatpush1.msra.mxu0 %v75
  %1280 = vmatprep.subr.mxu0 0.0
  %1281 = vmatpush1.msra.mxu0 %v76
  %1282 = vmatprep.subr.mxu0 0.0
  %1283 = vmatpush1.msra.mxu0 %v77
  %1284 = vmatprep.subr.mxu0 0.0
  %1285 = vmatpush1.msra.mxu0 %v78
  %1286 = vmatprep.subr.mxu0 0.0
  %1287 = vmatpush1.msra.mxu0 0.0
  %1288 = vmatprep.subr.mxu0 0.0
  %1289 = vmatpush1.msra.mxu0 0.0
  %1290 = vmatprep.subr.mxu0 0.0
  %1291 = vmatpush1.msra.mxu0 0.0
  %1292 = vmatprep.subr.mxu0 0.0
  %1293 = vmatpush1.msra.mxu0 0.0
  %1294 = vmatprep.subr.mxu0 0.0
  %1295 = vmatpush1.msra.mxu0 0.0
  %1296 = vmatprep.subr.mxu0 0.0
  %1297 = vmatpush1.msra.mxu0 0.0
  %1298 = vmatprep.subr.mxu0 0.0
  %1299 = vmatpush1.msra.mxu0 0.0
  %1300 = vmatprep.subr.mxu0 0.0
  %1301 = vmatpush1.msra.mxu0 0.0
  %1302 = vmatprep.subr.mxu0 0.0
  %1303 = vmatpush1.msra.mxu0 0.0
  %1304 = vmatprep.subr.mxu0 0.0
  %1305 = vmatpush1.msra.mxu0 0.0
  %1306 = vmatprep.subr.mxu0 0.0
  %1307 = vmatpush1.msra.mxu0 0.0
  %1308 = vmatprep.subr.mxu0 0.0
  %1309 = vmatpush1.msra.mxu0 0.0
  %1310 = vmatprep.subr.mxu0 0.0
  %1311 = vmatpush1.msra.mxu0 0.0
  %1312 = vmatprep.subr.mxu0 0.0
  %1313 = vmatpush1.msra.mxu0 0.0
  %1314 = vmatprep.subr.mxu0 0.0
  %1315 = vmatpush1.msra.mxu0 0.0
  %1316 = vmatprep.subr.mxu0 0.0
  %1317 = vmatpush1.msra.mxu0 0.0
  %1318 = vmatprep.subr.mxu0 0.0
  %1319 = vmatpush1.msra.mxu0 0.0
  %1320 = vmatprep.subr.mxu0 0.0
  %1321 = vmatpush1.msra.mxu0 0.0
  %1322 = vmatprep.subr.mxu0 0.0
  %1323 = vmatpush1.msra.mxu0 0.0
  %1324 = vmatprep.subr.mxu0 0.0
  %1325 = vmatpush1.msra.mxu0 0.0
  %1326 = vmatprep.subr.mxu0 0.0
  %1327 = vmatpush1.msra.mxu0 0.0
  %1328 = vmatprep.subr.mxu0 0.0
  %1329 = vmatpush1.msra.mxu0 0.0
  %1330 = vmatprep.subr.mxu0 0.0
  %1331 = vmatpush1.msra.mxu0 0.0
  %1332 = vmatprep.subr.mxu0 0.0
  %1333 = vmatpush1.msra.mxu0 0.0
  %1334 = vmatprep.subr.mxu0 0.0
  %1335 = vmatpush1.msra.mxu0 0.0
  %1336 = vmatprep.subr.mxu0 0.0
  %1337 = vmatpush1.msra.mxu0 0.0
  %1338 = vmatprep.subr.mxu0 0.0
  %1339 = vmatpush1.msra.mxu0 0.0
  %1340 = vmatprep.subr.mxu0 0.0
  %1341 = vmatpush1.msra.mxu0 0.0
  %1342 = vmatprep.mubr.f32.mxu0 0.0
  %1343 = vmatmul.mubr.f32.gmra.mrb[0].mxu0 %v1273
  %v1344 = vpop.f32.mrb[0].mxu0
  %v1345 = vadd.f32 %v1271, %v1344
  %v1346 = vpop.f32.mrb[0].mxu0
  %1347 = vmatprep.mubr.f32.mxu0 0.0
  %1348 = vmatmul.mubr.f32.gmra.mrb[0].mxu0 %v1276
  %v1349 = vpop.f32.mrb[0].mxu0
  %v1350 = vadd.f32 %v1271, %v1349
  %v1351 = vpop.f32.mrb[0].mxu0
  %1352 = vdwg.mxu0
  %v1353 = vmax.f32 %v1345, 0.0
  %v1354 = vmax.f32 %v1350, 0.0
  %v1355 = vlaneseq
  %v1356 = vshrl.u32 %v1355, 7
  %v1357 = vsub.s32 0, %v1356
  %v1358 = vrot.slane %v89, %v1357
  %1359 = vmatprep.subr.mxu0 0.0
  %1360 = vmatpush1.msra.mxu0 %v51
  %1361 = vmatprep.subr.mxu0 0.0
  %1362 = vmatpush1.msra.mxu0 %v52
  %1363 = vmatprep.subr.mxu0 0.0
  %1364 = vmatpush1.msra.mxu0 %v53
  %1365 = vmatprep.subr.mxu0 0.0
  %1366 = vmatpush1.msra.mxu0 %v54
  %1367 = vmatprep.subr.mxu0 0.0
  %1368 = vmatpush1.msra.mxu0 %v55
  %1369 = vmatprep.subr.mxu0 0.0
  %1370 = vmatpush1.msra.mxu0 %v56
  %1371 = vmatprep.subr.mxu0 0.0
  %1372 = vmatpush1.msra.mxu0 %v57
  %1373 = vmatprep.subr.mxu0 0.0
  %1374 = vmatpush1.msra.mxu0 %v58
  %1375 = vmatprep.subr.mxu0 0.0
  %1376 = vmatpush1.msra.mxu0 %v59
  %1377 = vmatprep.subr.mxu0 0.0
  %1378 = vmatpush1.msra.mxu0 %v60
  %1379 = vmatprep.subr.mxu0 0.0
  %1380 = vmatpush1.msra.mxu0 %v61
  %1381 = vmatprep.subr.mxu0 0.0
  %1382 = vmatpush1.msra.mxu0 %v62
  %1383 = vmatprep.subr.mxu0 0.0
  %1384 = vmatpush1.msra.mxu0 %v63
  %1385 = vmatprep.subr.mxu0 0.0
  %1386 = vmatpush1.msra.mxu0 %v64
  %1387 = vmatprep.subr.mxu0 0.0
  %1388 = vmatpush1.msra.mxu0 %v65
  %1389 = vmatprep.subr.mxu0 0.0
  %1390 = vmatpush1.msra.mxu0 %v66
  %1391 = vmatprep.subr.mxu0 0.0
  %1392 = vmatpush1.msra.mxu0 0.0
  %1393 = vmatprep.subr.mxu0 0.0
  %1394 = vmatpush1.msra.mxu0 0.0
  %1395 = vmatprep.subr.mxu0 0.0
  %1396 = vmatpush1.msra.mxu0 0.0
  %1397 = vmatprep.subr.mxu0 0.0
  %1398 = vmatpush1.msra.mxu0 0.0
  %1399 = vmatprep.subr.mxu0 0.0
  %1400 = vmatpush1.msra.mxu0 0.0
  %1401 = vmatprep.subr.mxu0 0.0
  %1402 = vmatpush1.msra.mxu0 0.0
  %1403 = vmatprep.subr.mxu0 0.0
  %1404 = vmatpush1.msra.mxu0 0.0
  %1405 = vmatprep.subr.mxu0 0.0
  %1406 = vmatpush1.msra.mxu0 0.0
  %1407 = vmatprep.subr.mxu0 0.0
  %1408 = vmatpush1.msra.mxu0 0.0
  %1409 = vmatprep.subr.mxu0 0.0
  %1410 = vmatpush1.msra.mxu0 0.0
  %1411 = vmatprep.subr.mxu0 0.0
  %1412 = vmatpush1.msra.mxu0 0.0
  %1413 = vmatprep.subr.mxu0 0.0
  %1414 = vmatpush1.msra.mxu0 0.0
  %1415 = vmatprep.subr.mxu0 0.0
  %1416 = vmatpush1.msra.mxu0 0.0
  %1417 = vmatprep.subr.mxu0 0.0
  %1418 = vmatpush1.msra.mxu0 0.0
  %1419 = vmatprep.subr.mxu0 0.0
  %1420 = vmatpush1.msra.mxu0 0.0
  %1421 = vmatprep.subr.mxu0 0.0
  %1422 = vmatpush1.msra.mxu0 0.0
  %1423 = vmatprep.mubr.f32.mxu0 0.0
  %1424 = vmatmul.mubr.f32.gmra.mrb[0].mxu0 %v1353
  %v1425 = vpop.f32.mrb[0].mxu0
  %v1426 = vadd.f32 %v1358, %v1425
  %v1427 = vpop.f32.mrb[0].mxu0
  %1428 = vmatprep.mubr.f32.mxu0 0.0
  %1429 = vmatmul.mubr.f32.gmra.mrb[0].mxu0 %v1354
  %v1430 = vpop.f32.mrb[0].mxu0
  %v1431 = vadd.f32 %v1358, %v1430
  %v1432 = vpop.f32.mrb[0].mxu0
  %1433 = vdwg.mxu0
  %v1434 = vadd.f32 %v1266, %v1426
  %v1435 = vadd.f32 %v1267, %v1431
  %v1436 = vsel %vm184, %v1434, 0.0
  %1437 = vadd.xlane.f32.xlu0 %v1436
  %v1438 = vpop.xlane.xlu0 %1437
  %v1439 = vsel %vm184, %v1435, 0.0
  %1440 = vadd.xlane.f32.xlu0 %v1439
  %v1441 = vpop.xlane.xlu0 %1440
  %v1442 = vmul.f32 %v1438, %v1235
  %v1443 = vmul.f32 %v1441, %v1235
  %v1444 = vsub.f32 %v1434, %v1442
  %v1445 = vsub.f32 %v1435, %v1443
  %v1446 = vmul.f32 %v1444, %v1444
  %v1447 = vmul.f32 %v1445, %v1445
  %v1448 = vsel %vm184, %v1446, 0.0
  %1449 = vadd.xlane.f32.xlu0 %v1448
  %v1450 = vpop.xlane.xlu0 %1449
  %v1451 = vsel %vm184, %v1447, 0.0
  %1452 = vadd.xlane.f32.xlu0 %v1451
  %v1453 = vpop.xlane.xlu0 %1452
  %v1454 = vmul.f32 %v1450, %v1235
  %v1455 = vmul.f32 %v1453, %v1235
  %v1456 = vadd.f32 %v1454, 1e-05
  %v1457 = vadd.f32 %v1455, 1e-05
  %v1458 = vrsqrt.pop %v1456
  %v1459 = vrsqrt.pop %v1457
  %v1460 = vmul.f32 %v1444, %v1458
  %v1461 = vmul.f32 %v1445, %v1459
  %v1462 = vlaneseq
  %v1463 = vshrl.u32 %v1462, 7
  %v1464 = vsub.s32 0, %v1463
  %v1465 = vrot.slane %v90, %v1464
  %v1466 = vmul.f32 %v1460, %v1465
  %v1467 = vmul.f32 %v1461, %v1465
  %v1468 = vlaneseq
  %v1469 = vshrl.u32 %v1468, 7
  %v1470 = vsub.s32 0, %v1469
  %v1471 = vrot.slane %v91, %v1470
  %v1472 = vadd.f32 %v1466, %v1471
  %v1473 = vadd.f32 %v1467, %v1471
  %v1474 = vsel %vm184, %v1472, 0.0
  %1475 = vadd.xlane.f32.xlu0 %v1474
  %v1476 = vpop.xlane.xlu0 %1475
  %v1477 = vsel %vm184, %v1473, 0.0
  %1478 = vadd.xlane.f32.xlu0 %v1477
  %v1479 = vpop.xlane.xlu0 %1478
  %v1480 = vmul.f32 %v1476, %v1235
  %v1481 = vmul.f32 %v1479, %v1235
  %v1482 = vsub.f32 %v1472, %v1480
  %v1483 = vsub.f32 %v1473, %v1481
  %v1484 = vmul.f32 %v1482, %v1482
  %v1485 = vmul.f32 %v1483, %v1483
  %v1486 = vsel %vm184, %v1484, 0.0
  %1487 = vadd.xlane.f32.xlu0 %v1486
  %v1488 = vpop.xlane.xlu0 %1487
  %v1489 = vsel %vm184, %v1485, 0.0
  %1490 = vadd.xlane.f32.xlu0 %v1489
  %v1491 = vpop.xlane.xlu0 %1490
  %v1492 = vmul.f32 %v1488, %v1235
  %v1493 = vmul.f32 %v1491, %v1235
  %v1494 = vadd.f32 %v1492, 1e-05
  %v1495 = vadd.f32 %v1493, 1e-05
  %v1496 = vrsqrt.pop %v1494
  %v1497 = vrsqrt.pop %v1495
  %v1498 = vmul.f32 %v1482, %v1496
  %v1499 = vmul.f32 %v1483, %v1497
  %v1500 = vlaneseq
  %v1501 = vshrl.u32 %v1500, 7
  %v1502 = vsub.s32 0, %v1501
  %v1503 = vrot.slane %v92, %v1502
  %v1504 = vmul.f32 %v1498, %v1503
  %v1505 = vmul.f32 %v1499, %v1503
  %v1506 = vlaneseq
  %v1507 = vshrl.u32 %v1506, 7
  %v1508 = vsub.s32 0, %v1507
  %v1509 = vrot.slane %v93, %v1508
  %v1510 = vadd.f32 %v1504, %v1509
  %v1511 = vadd.f32 %v1505, %v1509
  %v1512 = vlaneseq
  %v1513 = vshrl.u32 %v1512, 7
  %v1514 = vsub.s32 0, %v1513
  %v1515 = vrot.slane %v94, %v1514
  %v1517 = vsel %vm184, %v1510, 0
  %v1520 = vsel %vm184, %v1511, 0
  %1522 = vmatprep.subr.mxu0 0.0
  %1523 = vmatpush1.msra.mxu0 %v79
  %1524 = vmatprep.subr.mxu0 0.0
  %1525 = vmatpush1.msra.mxu0 %v80
  %1526 = vmatprep.subr.mxu0 0.0
  %1527 = vmatpush1.msra.mxu0 %v81
  %1528 = vmatprep.subr.mxu0 0.0
  %1529 = vmatpush1.msra.mxu0 %v82
  %1530 = vmatprep.subr.mxu0 0.0
  %1531 = vmatpush1.msra.mxu0 0.0
  %1532 = vmatprep.subr.mxu0 0.0
  %1533 = vmatpush1.msra.mxu0 0.0
  %1534 = vmatprep.subr.mxu0 0.0
  %1535 = vmatpush1.msra.mxu0 0.0
  %1536 = vmatprep.subr.mxu0 0.0
  %1537 = vmatpush1.msra.mxu0 0.0
  %1538 = vmatprep.subr.mxu0 0.0
  %1539 = vmatpush1.msra.mxu0 0.0
  %1540 = vmatprep.subr.mxu0 0.0
  %1541 = vmatpush1.msra.mxu0 0.0
  %1542 = vmatprep.subr.mxu0 0.0
  %1543 = vmatpush1.msra.mxu0 0.0
  %1544 = vmatprep.subr.mxu0 0.0
  %1545 = vmatpush1.msra.mxu0 0.0
  %1546 = vmatprep.subr.mxu0 0.0
  %1547 = vmatpush1.msra.mxu0 0.0
  %1548 = vmatprep.subr.mxu0 0.0
  %1549 = vmatpush1.msra.mxu0 0.0
  %1550 = vmatprep.subr.mxu0 0.0
  %1551 = vmatpush1.msra.mxu0 0.0
  %1552 = vmatprep.subr.mxu0 0.0
  %1553 = vmatpush1.msra.mxu0 0.0
  %1554 = vmatprep.subr.mxu0 0.0
  %1555 = vmatpush1.msra.mxu0 0.0
  %1556 = vmatprep.subr.mxu0 0.0
  %1557 = vmatpush1.msra.mxu0 0.0
  %1558 = vmatprep.subr.mxu0 0.0
  %1559 = vmatpush1.msra.mxu0 0.0
  %1560 = vmatprep.subr.mxu0 0.0
  %1561 = vmatpush1.msra.mxu0 0.0
  %1562 = vmatprep.subr.mxu0 0.0
  %1563 = vmatpush1.msra.mxu0 0.0
  %1564 = vmatprep.subr.mxu0 0.0
  %1565 = vmatpush1.msra.mxu0 0.0
  %1566 = vmatprep.subr.mxu0 0.0
  %1567 = vmatpush1.msra.mxu0 0.0
  %1568 = vmatprep.subr.mxu0 0.0
  %1569 = vmatpush1.msra.mxu0 0.0
  %1570 = vmatprep.subr.mxu0 0.0
  %1571 = vmatpush1.msra.mxu0 0.0
  %1572 = vmatprep.subr.mxu0 0.0
  %1573 = vmatpush1.msra.mxu0 0.0
  %1574 = vmatprep.subr.mxu0 0.0
  %1575 = vmatpush1.msra.mxu0 0.0
  %1576 = vmatprep.subr.mxu0 0.0
  %1577 = vmatpush1.msra.mxu0 0.0
  %1578 = vmatprep.subr.mxu0 0.0
  %1579 = vmatpush1.msra.mxu0 0.0
  %1580 = vmatprep.subr.mxu0 0.0
  %1581 = vmatpush1.msra.mxu0 0.0
  %1582 = vmatprep.subr.mxu0 0.0
  %1583 = vmatpush1.msra.mxu0 0.0
  %1584 = vmatprep.subr.mxu0 0.0
  %1585 = vmatpush1.msra.mxu0 0.0
  %1586 = vmatprep.mubr.f32.mxu0 0.0
  %1587 = vmatmul.mubr.f32.gmra.mrb[0].mxu0 %v1517
  %v1588 = vpop.f32.mrb[0].mxu0
  %v1589 = vadd.f32 %v1515, %v1588
  %v1590 = vpop.f32.mrb[0].mxu0
  %1591 = vmatprep.mubr.f32.mxu0 0.0
  %1592 = vmatmul.mubr.f32.gmra.mrb[0].mxu0 %v1520
  %v1593 = vpop.f32.mrb[0].mxu0
  %v1594 = vadd.f32 %v1515, %v1593
  %v1595 = vpop.f32.mrb[0].mxu0
  %1596 = vdwg.mxu0
  %v1597 = vmul.f32 %v1589, %v45
  %v1598 = vmul.f32 %v1594, %v46
  %v1599 = vadd.f32 %v1597, %v27
  %v1600 = vadd.f32 %v1598, %v28
  %vm1601 = vcmask 31744
  %1602 = vst.msk [vmem:[%s4] sm:$0xff] %vm1601, %v1599
  %1603 = vst.msk [vmem:[%s4 + $0x8] sm:$0xff] %vm1601, %v1600
  // Predicated region
  $region18: #{itransformer_forward.1} parent=0 // pred_check
    _
  $region19: #{itransformer_forward.1} parent=0 // pred_check_branch
    %1605 = sbr.rel (0) target = $region21
  $region20: #{itransformer_forward.1} parent=0 // pred_region
    _
  $region21: #{itransformer_forward.1} parent=0 // pred_fallthru
    _
  // Predicated region
  $region22: #{itransformer_forward.1} parent=0 // pred_check
    _
  $region23: #{itransformer_forward.1} parent=0 // pred_check_branch
    %1607 = sbr.rel (0) target = $region25
  $region24: #{itransformer_forward.1} parent=0 // pred_region
    _
  $region25: #{itransformer_forward.1} parent=0 // pred_fallthru
    _

</llo_original>
